<compile_context>
chip_gen: v7x
topology: tpu7x:2x2x1
jax: 0.10.0
libtpu: 0.0.40
codegen_flags: <defaults>
</compile_context>

<pallas_src>
import functools

import jax
import jax.numpy as jnp
from jax.experimental import pallas as pl
from jax.experimental.pallas import tpu as pltpu

LANE = 128      # TPU lane width: all feature slabs are padded to multiples of this
SUBLANE = 8


def _round_up(v, m):
    return (v + m - 1) // m * m


def _pad2(a, shape):
    return jnp.pad(a, [(0, t - s) for s, t in zip(a.shape, shape)])


# ----------------------------------------------------------------------------
# Fused kernel.
#   grid = (2, NT):
#     phase 0, tile i: conv1 rows -> relu / root-extend(x1) slabs -> xc @ W2 rows
#                      (stored bf16); per-graph root rows of x2 accumulated in f32.
#     phase 1, tile i: conv2 rows + relu, root_extend(x2) rows, single merged
#                      mean-pool accumulate; 1/count epilogue on the last tile.
# ----------------------------------------------------------------------------
def _bigcn_bu_kernel(a_ref, xw1_ref, b1_ref, w2_ref, b2_ref, rr1_ref,
                     rsel_ref, s_ref, st_ref, inv_ref,
                     o_ref,
                     xcw2_s, rr2_s, feat_s,
                     *, tm, hid_p, out_p, resident_a):
    f32, bf16 = jnp.float32, jnp.bfloat16
    phase = pl.program_id(0)
    i = pl.program_id(1)
    nt = pl.num_programs(1)
    row0 = pl.multiple_of(i * tm, tm)

    def a_tile():
        # Resident mode: whole A_hat sits in VMEM (constant index map -> one DMA for
        # the entire grid); slice the row tile locally.  Streamed mode: the BlockSpec
        # already delivers the (tm, n_p) row tile.
        if resident_a:
            return a_ref[pl.ds(row0, tm), :]
        return a_ref[...]

    # ------------- phase 0: conv1 rows -> xc slabs -> xc @ W2 rows (per tile) -------------
    @pl.when(phase == 0)
    def _():
        @pl.when(i == 0)
        def _():
            rr2_s[...] = jnp.zeros_like(rr2_s)

        # conv1 rows for this tile (pre-relu == x2 rows); bias/relu in f32 on the VPU.
        h1 = jnp.dot(a_tile(), xw1_ref[...], preferred_element_type=f32) + b1_ref[...]

        # Per-graph root rows of x2, accumulated tile-by-tile, kept f32 end-to-end.
        rr2_s[...] += jnp.dot(rsel_ref[...], h1, preferred_element_type=f32)

        # xc = [relu(conv1) | relu(root_extend(x1))]; feed the two 128-lane slabs
        # straight into the matching halves of W2 (no 256-wide concat is ever built).
        xc_left = jnp.maximum(h1, 0.0).astype(bf16)
        xc_right = jnp.maximum(
            jnp.dot(s_ref[...], rr1_ref[...], preferred_element_type=f32), 0.0
        ).astype(bf16)
        xcw2_s[pl.ds(row0, tm), :] = (
            jnp.dot(xc_left, w2_ref[:hid_p, :], preferred_element_type=f32)
            + jnp.dot(xc_right, w2_ref[hid_p:, :], preferred_element_type=f32)
        ).astype(bf16)

    # ------------- phase 1: conv2 + relu, root_extend(x2), fused mean-pool -------------
    @pl.when(phase == 1)
    def _():
        @pl.when(i == 0)
        def _():
            o_ref[...] = jnp.zeros_like(o_ref)

        h2 = jnp.maximum(
            jnp.dot(a_tile(), xcw2_s[...], preferred_element_type=f32) + b2_ref[...],
            0.0)                                                       # (tm, out_p)
        re2 = jnp.dot(s_ref[...], rr2_s[...],
                      preferred_element_type=f32)                      # NOT relu'd (matches ref)

        # Single pooling matmul: h2 | re2 written into adjacent 128-lane slabs of a
        # VMEM temp, then one (b_p, tm) @ (tm, out_p + hid_p) accumulate per tile.
        feat_s[:, :out_p] = h2
        feat_s[:, out_p:] = re2
        o_ref[...] += jnp.dot(st_ref[...], feat_s[...], preferred_element_type=f32)

        @pl.when(i == nt - 1)
        def _():
            o_ref[...] = o_ref[...] * inv_ref[...]                     # scatter_mean epilogue


# ----------------------------------------------------------------------------
# Graph operands + wrapper
# ----------------------------------------------------------------------------
def build_gcn_adj(edge_index, num_nodes):
    """Dense GCN-normalized adjacency (PyG gcn_norm default, flow source->target):
    A_hat[dst, src] = deg^-1/2[src] * deg^-1/2[dst], self-loops included,
    degree = in-degree after self-loops."""
    src, dst = edge_index
    loop = jnp.arange(num_nodes, dtype=src.dtype)
    src = jnp.concatenate([src, loop])
    dst = jnp.concatenate([dst, loop])
    deg = jnp.zeros((num_nodes,), jnp.float32).at[dst].add(1.0)
    dinv = jnp.where(deg > 0, 1.0 / jnp.sqrt(deg), 0.0)
    norm = dinv[src] * dinv[dst]
    return jnp.zeros((num_nodes, num_nodes), jnp.float32).at[dst, src].add(norm)


def _vmem_limit_bytes(n_p, tm, in_p, hid_p, out_p, b_p, resident_a):
    """Scoped-VMEM request sized from the operand/scratch arithmetic (defaults are
    16 MiB on v5e, 32 MiB on v6e/v7x).  Pallas double-buffers every BlockSpec by
    default; at production N, single-buffer the constant-index operands with
    pipeline_mode=pl.Buffered(1) to halve their footprint (omitted here: demo shapes
    are tiny and default buffering is the most portable path)."""
    dbl = 2
    by = 0
    by += dbl * (n_p * n_p if resident_a else tm * n_p) * 2        # A_hat (bf16)
    by += dbl * n_p * hid_p * 2                                    # X @ W1 (bf16)
    by += dbl * (hid_p + in_p) * out_p * 2                         # W2 (bf16)
    by += dbl * (hid_p + out_p) * 4                                # biases (f32)
    by += dbl * (b_p * in_p + b_p) * 4                             # rr1, 1/count (f32)
    by += dbl * 3 * b_p * tm * 4                                   # rsel / S / S^T tiles (f32)
    by += dbl * b_p * (out_p + hid_p) * 4                          # output block (f32)
    by += n_p * out_p * 2 + b_p * hid_p * 4 + tm * (out_p + hid_p) * 4   # scratch
    return int(min(max(by + (4 << 20), 16 << 20), 48 << 20))


def burumor_gcn_forward(x, bu_edge_index, batch, rootindex, params, num_graphs,
                        *, tm=128, resident_a=None):
    # TODO(synk): F.dropout(training=self.training) is identity at inference; not implemented.
    w1, b1, w2, b2 = params
    n, in_f = x.shape
    hid = w1.shape[1]
    out_f = w2.shape[1]

    in_p = _round_up(in_f, LANE)
    hid_p = _round_up(hid, LANE)
    out_p = _round_up(out_f, LANE)
    n_p = _round_up(n, tm)
    b_p = _round_up(num_graphs, SUBLANE)
    nt = n_p // tm

    x32 = x.astype(jnp.float32)
    a_hat = build_gcn_adj(bu_edge_index, n)

    # Hoisted to plain XLA (negligible next to the O(N^2) A_hat stream; removes the
    # old serialized (0,0) in-kernel block and the resident full-X VMEM buffer).
    xw1 = x32 @ w1                                    # X @ W1, f32
    rr1 = x32[rootindex]                              # root rows of x1, f32

    # --- padded operands: bf16 MXU operands, f32 biases / selection matrices ---
    a_p = _pad2(a_hat, (n_p, n_p)).astype(jnp.bfloat16)
    xw1_p = _pad2(xw1, (n_p, hid_p)).astype(jnp.bfloat16)
    b1_p = _pad2(b1.astype(jnp.float32), (1, hid_p))
    b2_p = _pad2(b2.astype(jnp.float32), (1, out_p))
    rr1_p = _pad2(rr1, (b_p, in_p))

    w2_p = jnp.zeros((hid_p + in_p, out_p), jnp.float32)
    w2_p = w2_p.at[:hid, :out_f].set(w2[:hid])                  # multiplies the conv1 slab
    w2_p = w2_p.at[hid_p:hid_p + in_f, :out_f].set(w2[hid:])    # multiplies the root-extend slab
    w2_p = w2_p.astype(jnp.bfloat16)

    nodes = jnp.arange(n)
    s = jnp.zeros((n_p, b_p), jnp.float32).at[nodes, batch].set(1.0)   # node -> its graph
    st = s.T                                                           # graph -> its nodes
    rsel = (jnp.zeros((b_p, n_p), jnp.float32)
            .at[jnp.arange(num_graphs), rootindex].set(1.0))           # root one-hot
    counts = jnp.zeros((b_p,), jnp.float32).at[batch].add(1.0)
    inv_counts = jnp.where(counts > 0, 1.0 / counts, 0.0).reshape(b_p, 1)

    if resident_a is None:
        # Keep A_hat resident (one DMA, reused by both phases) whenever its
        # double-buffered footprint fits comfortably in scoped VMEM on every
        # generation (v7x has only 64 MiB physical / 32 MiB default scoped).
        resident_a = 2 * n_p * n_p * 2 <= (20 << 20)

    if resident_a:
        a_spec = pl.BlockSpec((n_p, n_p), lambda p, i: (0, 0))    # DMA'd once, reused 2*nt times
    else:
        a_spec = pl.BlockSpec((tm, n_p), lambda p, i: (i, 0))     # streamed row tiles (per phase)

    const = lambda p, i: (0, 0)
    vmem_limit = _vmem_limit_bytes(n_p, tm, in_p, hid_p, out_p, b_p, resident_a)

    kernel = functools.partial(_bigcn_bu_kernel, tm=tm, hid_p=hid_p, out_p=out_p,
                               resident_a=resident_a)

    out_padded = pl.pallas_call(
        kernel,
        out_shape=jax.ShapeDtypeStruct((b_p, out_p + hid_p), jnp.float32),
        grid_spec=pltpu.PrefetchScalarGridSpec(
            num_scalar_prefetch=0,
            grid=(2, nt),                                              # (phase, row tile)
            in_specs=[
                a_spec,                                                # A_hat (bf16)
                pl.BlockSpec((n_p, hid_p), const),                     # X @ W1 (bf16)
                pl.BlockSpec((1, hid_p), const),                       # b1 (f32)
                pl.BlockSpec((hid_p + in_p, out_p), const),            # W2, two slabs (bf16)
                pl.BlockSpec((1, out_p), const),                       # b2 (f32)
                pl.BlockSpec((b_p, in_p), const),                      # root rows of x1 (f32)
                pl.BlockSpec((b_p, tm), lambda p, i: (0, i)),          # root one-hot column tile
                pl.BlockSpec((tm, b_p), lambda p, i: (i, 0)),          # membership one-hot row tile
                pl.BlockSpec((b_p, tm), lambda p, i: (0, i)),          # membership^T column tile
                pl.BlockSpec((b_p, 1), const),                         # 1/|graph| (f32)
            ],
            out_specs=pl.BlockSpec((b_p, out_p + hid_p), const),
            scratch_shapes=[
                pltpu.VMEM((n_p, out_p), jnp.bfloat16),                # xc @ W2 rows
                pltpu.VMEM((b_p, hid_p), jnp.float32),                 # root rows of x2 (f32)
                pltpu.VMEM((tm, out_p + hid_p), jnp.float32),          # [h2 | re2] pooling temp
            ],
        ),
        compiler_params=pltpu.CompilerParams(
            # Both grid axes carry persistent VMEM state (xcw2 / rr2 / output
            # accumulators), so both are "arbitrary".
            dimension_semantics=("arbitrary", "arbitrary"),
            vmem_limit_bytes=vmem_limit),
    )(a_p, xw1_p, b1_p, w2_p, b2_p, rr1_p, rsel, s, st, inv_counts)

    # Un-pad: left slab = pooled relu(conv2) columns, right slab = pooled x2 root-extend.
    return jnp.concatenate(
        [out_padded[:num_graphs, :out_f],
         out_padded[:num_graphs, out_p:out_p + hid]], axis=1)


# ----------------------------------------------------------------------------
# Pure-JAX reference (f32) mirroring the PyTorch module
# ----------------------------------------------------------------------------
def reference_forward(x, bu_edge_index, batch, rootindex, params, num_graphs):
    w1, b1, w2, b2 = params
    n = x.shape[0]
    a_hat = build_gcn_adj(bu_edge_index, n)
    x1 = x.astype(jnp.float32)
    h1 = a_hat @ (x1 @ w1) + b1                       # conv1
    x2 = h1
    root_of_node = rootindex[batch]
    xc = jax.nn.relu(jnp.concatenate([h1, x1[root_of_node]], axis=1))
    h2 = jax.nn.relu(a_hat @ (xc @ w2) + b2)          # conv2 + relu
    feat = jnp.concatenate([h2, x2[root_of_node]], axis=1)
    sums = jnp.zeros((num_graphs, feat.shape[1]), jnp.float32).at[batch].add(feat)
    cnt = jnp.zeros((num_graphs,), jnp.float32).at[batch].add(1.0)
    return sums / cnt[:, None]


if __name__ == "__main__":
    key = jax.random.PRNGKey(0)
    in_feats, hid_feats, out_feats = 8, 16, 16

    # Three rumor trees (bottom-up edges child -> parent), 150 nodes total, so the
    # padded node axis is 256 and the (phase, row-tile) grid really has 2 tiles.
    sizes = [60, 50, 40]
    num_graphs = len(sizes)
    batch_l, src_l, dst_l, root_l = [], [], [], []
    off = 0
    for g, sz in enumerate(sizes):
        root_l.append(off)
        batch_l += [g] * sz
        for j in range(1, sz):
            src_l.append(off + j)               # child
            dst_l.append(off + (j - 1) // 2)    # parent
        off += sz
    num_nodes = off
    batch = jnp.array(batch_l, jnp.int32)
    rootindex = jnp.array(root_l, jnp.int32)
    bu_edge_index = jnp.stack(
        [jnp.array(src_l, jnp.int32), jnp.array(dst_l, jnp.int32)])

    k_x, k_w1, k_b1, k_w2, k_b2 = jax.random.split(key, 5)
    x = jax.random.normal(k_x, (num_nodes, in_feats), jnp.float32)
    w1 = jax.random.normal(k_w1, (in_feats, hid_feats), jnp.float32) * 0.2
    b1 = jax.random.normal(k_b1, (1, hid_feats), jnp.float32) * 0.3
    w2 = jax.random.normal(k_w2, (hid_feats + in_feats, out_feats), jnp.float32) * 0.2
    b2 = jax.random.normal(k_b2, (1, out_feats), jnp.float32) * 0.3
    params = (w1, b1, w2, b2)

    ref = reference_forward(x, bu_edge_index, batch, rootindex, params, num_graphs)

    # Resident-A path (auto-selected at this size): A_hat is DMA'd into VMEM once.
    out = burumor_gcn_forward(x, bu_edge_index, batch, rootindex, params, num_graphs)
    out = jax.block_until_ready(out)
    assert out.shape == (num_graphs, out_feats + hid_feats)
    assert bool(jnp.all(jnp.isfinite(out)))
    err = float(jnp.max(jnp.abs(out - ref)))
    assert err < 1e-1, f"resident-A mismatch vs reference: max abs err {err}"

    # Streamed-A path (large-N fallback): A_hat row tiles are re-streamed per phase.
    out_s = burumor_gcn_forward(x, bu_edge_index, batch, rootindex, params, num_graphs,
                                resident_a=False)
    out_s = jax.block_until_ready(out_s)
    err_s = float(jnp.max(jnp.abs(out_s - ref)))
    assert err_s < 1e-1, f"streamed-A mismatch vs reference: max abs err {err_s}"

    print("KERNEL_OK")
</pallas_src>

<mosaic_0001>
module attributes {stable_mosaic.version = 11 : i64} {
  func.func @_bigcn_bu_kernel(%arg0: i32, %arg1: i32, %arg2: memref<256x256xbf16, #tpu.memory_space<vmem>>, %arg3: memref<256x128xbf16, #tpu.memory_space<vmem>>, %arg4: memref<1x128xf32, #tpu.memory_space<vmem>>, %arg5: memref<256x128xbf16, #tpu.memory_space<vmem>>, %arg6: memref<1x128xf32, #tpu.memory_space<vmem>>, %arg7: memref<8x128xf32, #tpu.memory_space<vmem>>, %arg8: memref<8x128xf32, #tpu.memory_space<vmem>>, %arg9: memref<128x8xf32, #tpu.memory_space<vmem>>, %arg10: memref<8x128xf32, #tpu.memory_space<vmem>>, %arg11: memref<8x1xf32, #tpu.memory_space<vmem>>, %arg12: memref<8x256xf32, #tpu.memory_space<vmem>>, %arg13: memref<256x128xbf16, #tpu.memory_space<vmem>>, %arg14: memref<8x128xf32, #tpu.memory_space<vmem>>, %arg15: memref<128x256xf32, #tpu.memory_space<vmem>>) attributes {dimension_semantics = [#tpu.dimension_semantics<arbitrary>, #tpu.dimension_semantics<arbitrary>], iteration_bounds = array<i64: 2, 2>, scalar_prefetch = 0 : i64, scratch_operands = 3 : i64, tpu.core_type = #tpu.core_type<tc>, window_params = [{pipeline_mode = #tpu.pipeline_mode<synchronous>, transform_indices = @transform_0, window_bounds = array<i64: 256, 256>}, {pipeline_mode = #tpu.pipeline_mode<synchronous>, transform_indices = @transform_1, window_bounds = array<i64: 256, 128>}, {pipeline_mode = #tpu.pipeline_mode<synchronous>, transform_indices = @transform_2, window_bounds = array<i64: 1, 128>}, {pipeline_mode = #tpu.pipeline_mode<synchronous>, transform_indices = @transform_3, window_bounds = array<i64: 256, 128>}, {pipeline_mode = #tpu.pipeline_mode<synchronous>, transform_indices = @transform_4, window_bounds = array<i64: 1, 128>}, {pipeline_mode = #tpu.pipeline_mode<synchronous>, transform_indices = @transform_5, window_bounds = array<i64: 8, 128>}, {transform_indices = @transform_6, window_bounds = array<i64: 8, 128>}, {transform_indices = @transform_7, window_bounds = array<i64: 128, 8>}, {transform_indices = @transform_8, window_bounds = array<i64: 8, 128>}, {pipeline_mode = #tpu.pipeline_mode<synchronous>, transform_indices = @transform_9, window_bounds = array<i64: 8, 1>}, {pipeline_mode = #tpu.pipeline_mode<synchronous>, transform_indices = @transform_10, window_bounds = array<i64: 8, 256>}]} {
    %c128_i32 = arith.constant 128 : i32
    %0 = arith.muli %arg1, %c128_i32 : i32
    %1 = tpu.assume_multiple %0, 128 : i32
    %c0_i32 = arith.constant 0 : i32
    %2 = arith.cmpi eq, %arg0, %c0_i32 : i32
    %3 = arith.extui %2 : i1 to i32
    %c0_i32_0 = arith.constant 0 : i32
    %4 = arith.cmpi ne, %3, %c0_i32_0 : i32
    scf.if %4 {
      %c0_i32_2 = arith.constant 0 : i32
      %8 = arith.cmpi eq, %arg1, %c0_i32_2 : i32
      %9 = arith.extui %8 : i1 to i32
      %c0_i32_3 = arith.constant 0 : i32
      %10 = arith.cmpi ne, %9, %c0_i32_3 : i32
      scf.if %10 {
        %cst_28 = arith.constant 0.000000e+00 : f32
        %40 = vector.broadcast %cst_28 : f32 to vector<8x128xf32>
        %c0_29 = arith.constant 0 : index
        %c0_30 = arith.constant 0 : index
        %41 = vector.load %arg14[%c0_29, %c0_30] : memref<8x128xf32, #tpu.memory_space<vmem>>, vector<8x128xf32>
        tpu.vector_store %arg14[%c0_29, %c0_30], %40 {strides = array<i32>} : memref<8x128xf32, #tpu.memory_space<vmem>>, vector<8x128xf32>,
      } else {
      }
      %11 = arith.index_cast %1 : i32 to index
      %c0 = arith.constant 0 : index
      %12 = vector.load %arg2[%11, %c0] : memref<256x256xbf16, #tpu.memory_space<vmem>>, vector<128x256xbf16>
      %c0_4 = arith.constant 0 : index
      %c0_5 = arith.constant 0 : index
      %13 = vector.load %arg3[%c0_4, %c0_5] : memref<256x128xbf16, #tpu.memory_space<vmem>>, vector<256x128xbf16>
      %cst = arith.constant dense<0.000000e+00> : vector<128x128xf32>
      %14 = tpu.matmul %12, %13, %cst {dimension_numbers = #tpu.dot_dimension_numbers<[1], [0], [0], [1], [0, 0, 1, 1], [], []>} : vector<128x256xbf16>, vector<256x128xbf16>, vector<128x128xf32> -> vector<128x128xf32>
      %c0_6 = arith.constant 0 : index
      %c0_7 = arith.constant 0 : index
      %15 = vector.load %arg4[%c0_6, %c0_7] : memref<1x128xf32, #tpu.memory_space<vmem>>, vector<1x128xf32>
      %16 = vector.broadcast %15 : vector<1x128xf32> to vector<128x128xf32>
      %17 = arith.addf %14, %16 : vector<128x128xf32>
      %c0_8 = arith.constant 0 : index
      %c0_9 = arith.constant 0 : index
      %18 = vector.load %arg14[%c0_8, %c0_9] : memref<8x128xf32, #tpu.memory_space<vmem>>, vector<8x128xf32>
      %c0_10 = arith.constant 0 : index
      %c0_11 = arith.constant 0 : index
      %19 = vector.load %arg8[%c0_10, %c0_11] : memref<8x128xf32, #tpu.memory_space<vmem>>, vector<8x128xf32>
      %cst_12 = arith.constant dense<0.000000e+00> : vector<8x128xf32>
      %20 = tpu.matmul %19, %17, %cst_12 {dimension_numbers = #tpu.dot_dimension_numbers<[1], [0], [0], [1], [0, 0, 1, 1], [], []>} : vector<8x128xf32>, vector<128x128xf32>, vector<8x128xf32> -> vector<8x128xf32>
      %21 = arith.addf %18, %20 : vector<8x128xf32>
      %c0_13 = arith.constant 0 : index
      %c0_14 = arith.constant 0 : index
      %22 = vector.load %arg14[%c0_13, %c0_14] : memref<8x128xf32, #tpu.memory_space<vmem>>, vector<8x128xf32>
      tpu.vector_store %arg14[%c0_13, %c0_14], %21 {strides = array<i32>} : memref<8x128xf32, #tpu.memory_space<vmem>>, vector<8x128xf32>,
      %cst_15 = arith.constant 0.000000e+00 : f32
      %23 = vector.broadcast %cst_15 : f32 to vector<128x128xf32>
      %24 = arith.maximumf %17, %23 : vector<128x128xf32>
      %25 = arith.truncf %24 : vector<128x128xf32> to vector<128x128xbf16>
      %c0_16 = arith.constant 0 : index
      %c0_17 = arith.constant 0 : index
      %26 = vector.load %arg9[%c0_16, %c0_17] : memref<128x8xf32, #tpu.memory_space<vmem>>, vector<128x8xf32>
      %c0_18 = arith.constant 0 : index
      %c0_19 = arith.constant 0 : index
      %27 = vector.load %arg7[%c0_18, %c0_19] : memref<8x128xf32, #tpu.memory_space<vmem>>, vector<8x128xf32>
      %cst_20 = arith.constant dense<0.000000e+00> : vector<128x128xf32>
      %28 = tpu.matmul %26, %27, %cst_20 {dimension_numbers = #tpu.dot_dimension_numbers<[1], [0], [0], [1], [0, 0, 1, 1], [], []>} : vector<128x8xf32>, vector<8x128xf32>, vector<128x128xf32> -> vector<128x128xf32>
      %cst_21 = arith.constant 0.000000e+00 : f32
      %29 = vector.broadcast %cst_21 : f32 to vector<128x128xf32>
      %30 = arith.maximumf %28, %29 : vector<128x128xf32>
      %31 = arith.truncf %30 : vector<128x128xf32> to vector<128x128xbf16>
      %c0_22 = arith.constant 0 : index
      %c0_23 = arith.constant 0 : index
      %32 = vector.load %arg5[%c0_22, %c0_23] : memref<256x128xbf16, #tpu.memory_space<vmem>>, vector<128x128xbf16>
      %cst_24 = arith.constant dense<0.000000e+00> : vector<128x128xf32>
      %33 = tpu.matmul %25, %32, %cst_24 {dimension_numbers = #tpu.dot_dimension_numbers<[1], [0], [0], [1], [0, 0, 1, 1], [], []>} : vector<128x128xbf16>, vector<128x128xbf16>, vector<128x128xf32> -> vector<128x128xf32>
      %c128 = arith.constant 128 : index
      %c0_25 = arith.constant 0 : index
      %34 = vector.load %arg5[%c128, %c0_25] : memref<256x128xbf16, #tpu.memory_space<vmem>>, vector<128x128xbf16>
      %cst_26 = arith.constant dense<0.000000e+00> : vector<128x128xf32>
      %35 = tpu.matmul %31, %34, %cst_26 {dimension_numbers = #tpu.dot_dimension_numbers<[1], [0], [0], [1], [0, 0, 1, 1], [], []>} : vector<128x128xbf16>, vector<128x128xbf16>, vector<128x128xf32> -> vector<128x128xf32>
      %36 = arith.addf %33, %35 : vector<128x128xf32>
      %37 = arith.truncf %36 : vector<128x128xf32> to vector<128x128xbf16>
      %38 = arith.index_cast %1 : i32 to index
      %c0_27 = arith.constant 0 : index
      %39 = vector.load %arg13[%38, %c0_27] : memref<256x128xbf16, #tpu.memory_space<vmem>>, vector<128x128xbf16>
      tpu.vector_store %arg13[%38, %c0_27], %37 {strides = array<i32>} : memref<256x128xbf16, #tpu.memory_space<vmem>>, vector<128x128xbf16>,
    } else {
    }
    %c1_i32 = arith.constant 1 : i32
    %5 = arith.cmpi eq, %arg0, %c1_i32 : i32
    %6 = arith.extui %5 : i1 to i32
    %c0_i32_1 = arith.constant 0 : i32
    %7 = arith.cmpi ne, %6, %c0_i32_1 : i32
    scf.if %7 {
      %c0_i32_2 = arith.constant 0 : i32
      %8 = arith.cmpi eq, %arg1, %c0_i32_2 : i32
      %9 = arith.extui %8 : i1 to i32
      %c0_i32_3 = arith.constant 0 : i32
      %10 = arith.cmpi ne, %9, %c0_i32_3 : i32
      scf.if %10 {
        %cst_28 = arith.constant 0.000000e+00 : f32
        %34 = vector.broadcast %cst_28 : f32 to vector<8x256xf32>
        %c0_29 = arith.constant 0 : index
        %c0_30 = arith.constant 0 : index
        %35 = vector.load %arg12[%c0_29, %c0_30] : memref<8x256xf32, #tpu.memory_space<vmem>>, vector<8x256xf32>
        tpu.vector_store %arg12[%c0_29, %c0_30], %34 {strides = array<i32>} : memref<8x256xf32, #tpu.memory_space<vmem>>, vector<8x256xf32>,
      } else {
      }
      %11 = arith.index_cast %1 : i32 to index
      %c0 = arith.constant 0 : index
      %12 = vector.load %arg2[%11, %c0] : memref<256x256xbf16, #tpu.memory_space<vmem>>, vector<128x256xbf16>
      %c0_4 = arith.constant 0 : index
      %c0_5 = arith.constant 0 : index
      %13 = vector.load %arg13[%c0_4, %c0_5] : memref<256x128xbf16, #tpu.memory_space<vmem>>, vector<256x128xbf16>
      %cst = arith.constant dense<0.000000e+00> : vector<128x128xf32>
      %14 = tpu.matmul %12, %13, %cst {dimension_numbers = #tpu.dot_dimension_numbers<[1], [0], [0], [1], [0, 0, 1, 1], [], []>} : vector<128x256xbf16>, vector<256x128xbf16>, vector<128x128xf32> -> vector<128x128xf32>
      %c0_6 = arith.constant 0 : index
      %c0_7 = arith.constant 0 : index
      %15 = vector.load %arg6[%c0_6, %c0_7] : memref<1x128xf32, #tpu.memory_space<vmem>>, vector<1x128xf32>
      %16 = vector.broadcast %15 : vector<1x128xf32> to vector<128x128xf32>
      %17 = arith.addf %14, %16 : vector<128x128xf32>
      %cst_8 = arith.constant 0.000000e+00 : f32
      %18 = vector.broadcast %cst_8 : f32 to vector<128x128xf32>
      %19 = arith.maximumf %17, %18 : vector<128x128xf32>
      %c0_9 = arith.constant 0 : index
      %c0_10 = arith.constant 0 : index
      %20 = vector.load %arg9[%c0_9, %c0_10] : memref<128x8xf32, #tpu.memory_space<vmem>>, vector<128x8xf32>
      %c0_11 = arith.constant 0 : index
      %c0_12 = arith.constant 0 : index
      %21 = vector.load %arg14[%c0_11, %c0_12] : memref<8x128xf32, #tpu.memory_space<vmem>>, vector<8x128xf32>
      %cst_13 = arith.constant dense<0.000000e+00> : vector<128x128xf32>
      %22 = tpu.matmul %20, %21, %cst_13 {dimension_numbers = #tpu.dot_dimension_numbers<[1], [0], [0], [1], [0, 0, 1, 1], [], []>} : vector<128x8xf32>, vector<8x128xf32>, vector<128x128xf32> -> vector<128x128xf32>
      %c0_14 = arith.constant 0 : index
      %c0_15 = arith.constant 0 : index
      %23 = vector.load %arg15[%c0_14, %c0_15] : memref<128x256xf32, #tpu.memory_space<vmem>>, vector<128x128xf32>
      tpu.vector_store %arg15[%c0_14, %c0_15], %19 {strides = array<i32>} : memref<128x256xf32, #tpu.memory_space<vmem>>, vector<128x128xf32>,
      %c0_16 = arith.constant 0 : index
      %c128 = arith.constant 128 : index
      %24 = vector.load %arg15[%c0_16, %c128] : memref<128x256xf32, #tpu.memory_space<vmem>>, vector<128x128xf32>
      tpu.vector_store %arg15[%c0_16, %c128], %22 {strides = array<i32>} : memref<128x256xf32, #tpu.memory_space<vmem>>, vector<128x128xf32>,
      %c0_17 = arith.constant 0 : index
      %c0_18 = arith.constant 0 : index
      %25 = vector.load %arg12[%c0_17, %c0_18] : memref<8x256xf32, #tpu.memory_space<vmem>>, vector<8x256xf32>
      %c0_19 = arith.constant 0 : index
      %c0_20 = arith.constant 0 : index
      %26 = vector.load %arg10[%c0_19, %c0_20] : memref<8x128xf32, #tpu.memory_space<vmem>>, vector<8x128xf32>
      %c0_21 = arith.constant 0 : index
      %c0_22 = arith.constant 0 : index
      %27 = vector.load %arg15[%c0_21, %c0_22] : memref<128x256xf32, #tpu.memory_space<vmem>>, vector<128x256xf32>
      %cst_23 = arith.constant dense<0.000000e+00> : vector<8x256xf32>
      %28 = tpu.matmul %26, %27, %cst_23 {dimension_numbers = #tpu.dot_dimension_numbers<[1], [0], [0], [1], [0, 0, 1, 1], [], []>} : vector<8x128xf32>, vector<128x256xf32>, vector<8x256xf32> -> vector<8x256xf32>
      %29 = arith.addf %25, %28 : vector<8x256xf32>
      %c0_24 = arith.constant 0 : index
      %c0_25 = arith.constant 0 : index
      %30 = vector.load %arg12[%c0_24, %c0_25] : memref<8x256xf32, #tpu.memory_space<vmem>>, vector<8x256xf32>
      tpu.vector_store %arg12[%c0_24, %c0_25], %29 {strides = array<i32>} : memref<8x256xf32, #tpu.memory_space<vmem>>, vector<8x256xf32>,
      %c1_i32_26 = arith.constant 1 : i32
      %31 = arith.cmpi eq, %arg1, %c1_i32_26 : i32
      %32 = arith.extui %31 : i1 to i32
      %c0_i32_27 = arith.constant 0 : i32
      %33 = arith.cmpi ne, %32, %c0_i32_27 : i32
      scf.if %33 {
        %c0_28 = arith.constant 0 : index
        %c0_29 = arith.constant 0 : index
        %34 = vector.load %arg12[%c0_28, %c0_29] : memref<8x256xf32, #tpu.memory_space<vmem>>, vector<8x256xf32>
        %c0_30 = arith.constant 0 : index
        %c0_31 = arith.constant 0 : index
        %35 = vector.load %arg11[%c0_30, %c0_31] : memref<8x1xf32, #tpu.memory_space<vmem>>, vector<8x1xf32>
        %36 = vector.broadcast %35 : vector<8x1xf32> to vector<8x256xf32>
        %37 = arith.mulf %34, %36 : vector<8x256xf32>
        %c0_32 = arith.constant 0 : index
        %c0_33 = arith.constant 0 : index
        %38 = vector.load %arg12[%c0_32, %c0_33] : memref<8x256xf32, #tpu.memory_space<vmem>>, vector<8x256xf32>
        tpu.vector_store %arg12[%c0_32, %c0_33], %37 {strides = array<i32>} : memref<8x256xf32, #tpu.memory_space<vmem>>, vector<8x256xf32>,
      } else {
      }
    } else {
    }
    return
  }
  func.func @transform_0(%arg0: i32, %arg1: i32) -> (i32, i32) {
    %c0_i32 = arith.constant 0 : i32
    %c0_i32_0 = arith.constant 0 : i32
    %c0_i32_1 = arith.constant 0 : i32
    return %c0_i32, %c0_i32_0 : i32, i32
  }
  func.func @transform_1(%arg0: i32, %arg1: i32) -> (i32, i32) {
    %c0_i32 = arith.constant 0 : i32
    %c0_i32_0 = arith.constant 0 : i32
    %c0_i32_1 = arith.constant 0 : i32
    return %c0_i32, %c0_i32_0 : i32, i32
  }
  func.func @transform_2(%arg0: i32, %arg1: i32) -> (i32, i32) {
    %c0_i32 = arith.constant 0 : i32
    %c0_i32_0 = arith.constant 0 : i32
    %c0_i32_1 = arith.constant 0 : i32
    return %c0_i32, %c0_i32_0 : i32, i32
  }
  func.func @transform_3(%arg0: i32, %arg1: i32) -> (i32, i32) {
    %c0_i32 = arith.constant 0 : i32
    %c0_i32_0 = arith.constant 0 : i32
    %c0_i32_1 = arith.constant 0 : i32
    return %c0_i32, %c0_i32_0 : i32, i32
  }
  func.func @transform_4(%arg0: i32, %arg1: i32) -> (i32, i32) {
    %c0_i32 = arith.constant 0 : i32
    %c0_i32_0 = arith.constant 0 : i32
    %c0_i32_1 = arith.constant 0 : i32
    return %c0_i32, %c0_i32_0 : i32, i32
  }
  func.func @transform_5(%arg0: i32, %arg1: i32) -> (i32, i32) {
    %c0_i32 = arith.constant 0 : i32
    %c0_i32_0 = arith.constant 0 : i32
    %c0_i32_1 = arith.constant 0 : i32
    return %c0_i32, %c0_i32_0 : i32, i32
  }
  func.func @transform_6(%arg0: i32, %arg1: i32) -> (i32, i32) {
    %c0_i32 = arith.constant 0 : i32
    %c0_i32_0 = arith.constant 0 : i32
    return %c0_i32, %arg1 : i32, i32
  }
  func.func @transform_7(%arg0: i32, %arg1: i32) -> (i32, i32) {
    %c0_i32 = arith.constant 0 : i32
    %c0_i32_0 = arith.constant 0 : i32
    return %arg1, %c0_i32 : i32, i32
  }
  func.func @transform_8(%arg0: i32, %arg1: i32) -> (i32, i32) {
    %c0_i32 = arith.constant 0 : i32
    %c0_i32_0 = arith.constant 0 : i32
    return %c0_i32, %arg1 : i32, i32
  }
  func.func @transform_9(%arg0: i32, %arg1: i32) -> (i32, i32) {
    %c0_i32 = arith.constant 0 : i32
    %c0_i32_0 = arith.constant 0 : i32
    %c0_i32_1 = arith.constant 0 : i32
    return %c0_i32, %c0_i32_0 : i32, i32
  }
  func.func @transform_10(%arg0: i32, %arg1: i32) -> (i32, i32) {
    %c0_i32 = arith.constant 0 : i32
    %c0_i32_0 = arith.constant 0 : i32
    %c0_i32_1 = arith.constant 0 : i32
    return %c0_i32, %c0_i32_0 : i32, i32
  }
}

</mosaic_0001>

<llo_original>
// kernel: tpu_custom_call.1
$region0: #{tpu_custom_call.1}
  #allocation0 [shape = 'u32[]', space=smem, size = 0x4, offset = 0x4, fixed_abs, tag = 'smem constant byte address 0x4 - core index']
  #allocation1 [shape = 'u32[144,128]{1,0:T(1,128)}', space=vmem, size = 0x12000, scoped, tag = 'internal scratch']
  #allocation2 [shape = 'bf16[256,128]{1,0:T(16,128)(2,1)}', space=vmem, size = 0x10000, scoped, tag = 'scratch operand']
  #allocation3 [shape = 'f32[8,128]{1,0:T(8,128)}', space=vmem, size = 0x1000, scoped, tag = 'scratch operand']
  #allocation4 [shape = 'f32[128,256]{1,0:T(8,128)}', space=vmem, size = 0x20000, scoped, tag = 'scratch operand']
  %s0 = inlined_call_operand.vmem [shape: bf16[256,256], index: 0, kind: input, shape index: {}]
  %s1 = inlined_call_operand.hbm [shape: bf16[256,128], index: 1, kind: input, shape index: {}]
  %s2 = inlined_call_operand.vmem [shape: f32[1,128], index: 2, kind: input, shape index: {}]
  %s3 = inlined_call_operand.hbm [shape: bf16[256,128], index: 3, kind: input, shape index: {}]
  %s4 = inlined_call_operand.vmem [shape: f32[1,128], index: 4, kind: input, shape index: {}]
  %s5 = inlined_call_operand.hbm [shape: f32[8,128], index: 5, kind: input, shape index: {}]
  %s6 = inlined_call_operand.vmem [shape: f32[8,256], index: 6, kind: input, shape index: {}]
  %s7 = inlined_call_operand.vmem [shape: f32[256,8], index: 7, kind: input, shape index: {}]
  %s8 = inlined_call_operand.vmem [shape: f32[8,256], index: 8, kind: input, shape index: {}]
  %s9 = inlined_call_operand.vmem [shape: f32[8,1], index: 9, kind: input, shape index: {}]
  %s10 = inlined_call_operand.hbm [shape: f32[8,256], index: 10, kind: output, shape index: {}]
  %s11 = sld [smem:[#allocation0]]
  $region105: #{tpu_custom_call.1} parent=0
    _
  %s13 = ssub.s32 1, %s11
  %s14 = scalar_select 0, %s13, %s11
  $region1: #{tpu_custom_call.1} parent=0
    #allocation5 [shape = 'u8[65536]{0}', space=vmem, size = 0x10000, scoped, tag = 'input window, operand 1, single buffered']
    #allocation6 [shape = 's32[2]{0}', space=sflag, size = 0x8, scoped, tag = 'scoped memory for tpu_custom_call.1']
    #allocation7 [shape = 's32[2]{0}', space=sflag, size = 0x8, scoped, tag = 'scoped memory for tpu_custom_call.1']
    #allocation8 [shape = 'u8[65536]{0}', space=vmem, size = 0x10000, scoped, tag = 'input window, operand 3, single buffered']
    #allocation9 [shape = 's32[1]{0}', space=sflag, size = 0x4, scoped, tag = 'scoped memory for tpu_custom_call.1']
    #allocation10 [shape = 'u8[4096]{0}', space=vmem, size = 0x1000, scoped, tag = 'input window, operand 5, single buffered']
    #allocation11 [shape = 'u8[8192]{0}', space=vmem, size = 0x2000, scoped, tag = 'output window, operand 0, single buffered']
    %15 = vsyncpa [#allocation6], 0
    %16 = vsyncpa [#allocation9], 0
    %17 = vsyncpa [#allocation7], 0
    loop: start=0, step=1, limit=6
    $region2: #{tpu_custom_call.1} parent=1 // loop_pre_header
      _
    $region3: #{tpu_custom_call.1} parent=1 // loop_header
      %s19 = sphi 0, %s23
      %p20 = scmp.ge.s32.totalorder %s19, 6
      %s26 = sphi 0, %s38
      %s27 = sphi 0, %s34
      %s28 = sphi 0, %s26
      %s29 = sphi 0, %s27
      %s30 = sphi 0, %s28
      %s31 = sphi 0, %s29
      %s39 = sphi 0, %s39
      %s41 = sphi 0, %s39
      %s42 = sphi 0, %s41
      %s56 = sphi 0, %s42
      %s60 = sphi 0, %s60
      %s62 = sphi 0, %s60
      %s63 = sphi 0, %s62
      %s77 = sphi 0, %s63
      %s81 = sphi 0, %s81
      %s83 = sphi 0, %s81
      %s84 = sphi 0, %s83
      %s98 = sphi 0, %s84
      %s102 = sphi 0, %s102
      %s104 = sphi 0, %s102
      %s105 = sphi 0, %s104
      %s119 = sphi 0, %s105
      %s123 = sphi 0, %s123
      %s125 = sphi 0, %s123
      %s126 = sphi 0, %s125
      %s140 = sphi 0, %s126
      %s144 = sphi 0, %s144
      %s146 = sphi 0, %s144
      %s147 = sphi 0, %s146
      %s161 = sphi 0, %s147
      %s167 = sphi 0, %s169
      %s170 = sphi 0, %s167
      %s171 = sphi 0, %s170
      %s187 = sphi 0, %s171
      %s193 = sphi 0, %s195
      %s196 = sphi 0, %s193
      %s197 = sphi 0, %s196
      %s213 = sphi 0, %s197
      %s219 = sphi 0, %s221
      %s222 = sphi 0, %s219
      %s223 = sphi 0, %s222
      %s239 = sphi 0, %s223
      %s243 = sphi 0, %s243
      %s245 = sphi 0, %s243
      %s246 = sphi 0, %s245
      %s260 = sphi 0, %s246
      %s264 = sphi 0, %s264
      %s266 = sphi 0, %s264
      %s267 = sphi 0, %s266
      %s281 = sphi 0, %s267
    $region4: #{tpu_custom_call.1} parent=1 // loop_header_branch
      %22 = sbr.rel (%p20) target = $region8
    $region5: #{tpu_custom_call.1} parent=1 // loop_body
      %s24 = ssub.s32 %s19, 1
      %s25 = ssub.s32 %s19, 2
      %s32 = sadd.s32 1, %s27
      %p33 = scmp.ge.s32.totalorder %s32, 2
      %s34 = scalar_select %p33, 0, %s32
      %s35 = sadd.s32 1, %s26
      %s36 = scalar_select %p33, %s35, %s26
      %p37 = scmp.ge.s32.totalorder %s36, 2
      %s38 = scalar_select %p37, 0, %s36
      %s40 = sadd.s32 %s39, 1
      %p43 = scmp.eq.s32.totalorder %s19, 3
      %p44 = scmp.ne.s32.totalorder %s39, %s41
      %p45 = scmp.eq.s32.totalorder %s19, 0
      %p46 = por %p44, %p45
      %p47 = scmp.ne.s32.totalorder %s39, %s41
      %p48 = scmp.eq.s32.totalorder %s24, 3
      %p49 = por %p47, %p48
      %p50 = scmp.ne.s32.totalorder %s41, %s42
      %p51 = scmp.eq.s32.totalorder %s24, 0
      %p52 = por %p50, %p51
      %p53 = scmp.ne.s32.totalorder %s41, %s42
      %p54 = scmp.eq.s32.totalorder %s25, 3
      %p55 = por %p53, %p54
      %p57 = scmp.ne.s32.totalorder %s42, %s56
      %p58 = scmp.eq.s32.totalorder %s25, 0
      %p59 = por %p57, %p58
      %s61 = sadd.s32 %s60, 1
      %p64 = scmp.eq.s32.totalorder %s19, 3
      %p65 = scmp.ne.s32.totalorder %s60, %s62
      %p66 = scmp.eq.s32.totalorder %s19, 0
      %p67 = por %p65, %p66
      %p68 = scmp.ne.s32.totalorder %s60, %s62
      %p69 = scmp.eq.s32.totalorder %s24, 3
      %p70 = por %p68, %p69
      %p71 = scmp.ne.s32.totalorder %s62, %s63
      %p72 = scmp.eq.s32.totalorder %s24, 0
      %p73 = por %p71, %p72
      %p74 = scmp.ne.s32.totalorder %s62, %s63
      %p75 = scmp.eq.s32.totalorder %s25, 3
      %p76 = por %p74, %p75
      %p78 = scmp.ne.s32.totalorder %s63, %s77
      %p79 = scmp.eq.s32.totalorder %s25, 0
      %p80 = por %p78, %p79
      %s82 = sadd.s32 %s81, 1
      %p85 = scmp.eq.s32.totalorder %s19, 3
      %p86 = scmp.ne.s32.totalorder %s81, %s83
      %p87 = scmp.eq.s32.totalorder %s19, 0
      %p88 = por %p86, %p87
      %p89 = scmp.ne.s32.totalorder %s81, %s83
      %p90 = scmp.eq.s32.totalorder %s24, 3
      %p91 = por %p89, %p90
      %p92 = scmp.ne.s32.totalorder %s83, %s84
      %p93 = scmp.eq.s32.totalorder %s24, 0
      %p94 = por %p92, %p93
      %p95 = scmp.ne.s32.totalorder %s83, %s84
      %p96 = scmp.eq.s32.totalorder %s25, 3
      %p97 = por %p95, %p96
      %p99 = scmp.ne.s32.totalorder %s84, %s98
      %p100 = scmp.eq.s32.totalorder %s25, 0
      %p101 = por %p99, %p100
      %s103 = sadd.s32 %s102, 1
      %p106 = scmp.eq.s32.totalorder %s19, 3
      %p107 = scmp.ne.s32.totalorder %s102, %s104
      %p108 = scmp.eq.s32.totalorder %s19, 0
      %p109 = por %p107, %p108
      %p110 = scmp.ne.s32.totalorder %s102, %s104
      %p111 = scmp.eq.s32.totalorder %s24, 3
      %p112 = por %p110, %p111
      %p113 = scmp.ne.s32.totalorder %s104, %s105
      %p114 = scmp.eq.s32.totalorder %s24, 0
      %p115 = por %p113, %p114
      %p116 = scmp.ne.s32.totalorder %s104, %s105
      %p117 = scmp.eq.s32.totalorder %s25, 3
      %p118 = por %p116, %p117
      %p120 = scmp.ne.s32.totalorder %s105, %s119
      %p121 = scmp.eq.s32.totalorder %s25, 0
      %p122 = por %p120, %p121
      %s124 = sadd.s32 %s123, 1
      %p127 = scmp.eq.s32.totalorder %s19, 3
      %p128 = scmp.ne.s32.totalorder %s123, %s125
      %p129 = scmp.eq.s32.totalorder %s19, 0
      %p130 = por %p128, %p129
      %p131 = scmp.ne.s32.totalorder %s123, %s125
      %p132 = scmp.eq.s32.totalorder %s24, 3
      %p133 = por %p131, %p132
      %p134 = scmp.ne.s32.totalorder %s125, %s126
      %p135 = scmp.eq.s32.totalorder %s24, 0
      %p136 = por %p134, %p135
      %p137 = scmp.ne.s32.totalorder %s125, %s126
      %p138 = scmp.eq.s32.totalorder %s25, 3
      %p139 = por %p137, %p138
      %p141 = scmp.ne.s32.totalorder %s126, %s140
      %p142 = scmp.eq.s32.totalorder %s25, 0
      %p143 = por %p141, %p142
      %s145 = sadd.s32 %s144, 1
      %p148 = scmp.eq.s32.totalorder %s19, 3
      %p149 = scmp.ne.s32.totalorder %s144, %s146
      %p150 = scmp.eq.s32.totalorder %s19, 0
      %p151 = por %p149, %p150
      %p152 = scmp.ne.s32.totalorder %s144, %s146
      %p153 = scmp.eq.s32.totalorder %s24, 3
      %p154 = por %p152, %p153
      %p155 = scmp.ne.s32.totalorder %s146, %s147
      %p156 = scmp.eq.s32.totalorder %s24, 0
      %p157 = por %p155, %p156
      %p158 = scmp.ne.s32.totalorder %s146, %s147
      %p159 = scmp.eq.s32.totalorder %s25, 3
      %p160 = por %p158, %p159
      %p162 = scmp.ne.s32.totalorder %s147, %s161
      %p163 = scmp.eq.s32.totalorder %s25, 0
      %p164 = por %p162, %p163
      %s165 = ssub.s32 %s27, %s34
      %p166 = scmp.eq.s32.totalorder %s165, 0
      %s168 = sadd.s32 %s167, 1
      %s169 = scalar_select %p166, %s167, %s168
      %p172 = pneg %p166
      %p173 = scmp.eq.s32.totalorder %s19, 3
      %p174 = por %p172, %p173
      %p175 = scmp.ne.s32.totalorder %s167, %s170
      %p176 = scmp.eq.s32.totalorder %s19, 0
      %p177 = por %p175, %p176
      %p178 = scmp.ne.s32.totalorder %s167, %s170
      %p179 = scmp.eq.s32.totalorder %s24, 3
      %p180 = por %p178, %p179
      %p181 = scmp.ne.s32.totalorder %s170, %s171
      %p182 = scmp.eq.s32.totalorder %s24, 0
      %p183 = por %p181, %p182
      %p184 = scmp.ne.s32.totalorder %s170, %s171
      %p185 = scmp.eq.s32.totalorder %s25, 3
      %p186 = por %p184, %p185
      %p188 = scmp.ne.s32.totalorder %s171, %s187
      %p189 = scmp.eq.s32.totalorder %s25, 0
      %p190 = por %p188, %p189
      %s191 = ssub.s32 %s27, %s34
      %p192 = scmp.eq.s32.totalorder %s191, 0
      %s194 = sadd.s32 %s193, 1
      %s195 = scalar_select %p192, %s193, %s194
      %p198 = pneg %p192
      %p199 = scmp.eq.s32.totalorder %s19, 3
      %p200 = por %p198, %p199
      %p201 = scmp.ne.s32.totalorder %s193, %s196
      %p202 = scmp.eq.s32.totalorder %s19, 0
      %p203 = por %p201, %p202
      %p204 = scmp.ne.s32.totalorder %s193, %s196
      %p205 = scmp.eq.s32.totalorder %s24, 3
      %p206 = por %p204, %p205
      %p207 = scmp.ne.s32.totalorder %s196, %s197
      %p208 = scmp.eq.s32.totalorder %s24, 0
      %p209 = por %p207, %p208
      %p210 = scmp.ne.s32.totalorder %s196, %s197
      %p211 = scmp.eq.s32.totalorder %s25, 3
      %p212 = por %p210, %p211
      %p214 = scmp.ne.s32.totalorder %s197, %s213
      %p215 = scmp.eq.s32.totalorder %s25, 0
      %p216 = por %p214, %p215
      %s217 = ssub.s32 %s27, %s34
      %p218 = scmp.eq.s32.totalorder %s217, 0
      %s220 = sadd.s32 %s219, 1
      %s221 = scalar_select %p218, %s219, %s220
      %p224 = pneg %p218
      %p225 = scmp.eq.s32.totalorder %s19, 3
      %p226 = por %p224, %p225
      %p227 = scmp.ne.s32.totalorder %s219, %s222
      %p228 = scmp.eq.s32.totalorder %s19, 0
      %p229 = por %p227, %p228
      %p230 = scmp.ne.s32.totalorder %s219, %s222
      %p231 = scmp.eq.s32.totalorder %s24, 3
      %p232 = por %p230, %p231
      %p233 = scmp.ne.s32.totalorder %s222, %s223
      %p234 = scmp.eq.s32.totalorder %s24, 0
      %p235 = por %p233, %p234
      %p236 = scmp.ne.s32.totalorder %s222, %s223
      %p237 = scmp.eq.s32.totalorder %s25, 3
      %p238 = por %p236, %p237
      %p240 = scmp.ne.s32.totalorder %s223, %s239
      %p241 = scmp.eq.s32.totalorder %s25, 0
      %p242 = por %p240, %p241
      %s244 = sadd.s32 %s243, 1
      %p247 = scmp.eq.s32.totalorder %s19, 3
      %p248 = scmp.ne.s32.totalorder %s243, %s245
      %p249 = scmp.eq.s32.totalorder %s19, 0
      %p250 = por %p248, %p249
      %p251 = scmp.ne.s32.totalorder %s243, %s245
      %p252 = scmp.eq.s32.totalorder %s24, 3
      %p253 = por %p251, %p252
      %p254 = scmp.ne.s32.totalorder %s245, %s246
      %p255 = scmp.eq.s32.totalorder %s24, 0
      %p256 = por %p254, %p255
      %p257 = scmp.ne.s32.totalorder %s245, %s246
      %p258 = scmp.eq.s32.totalorder %s25, 3
      %p259 = por %p257, %p258
      %p261 = scmp.ne.s32.totalorder %s246, %s260
      %p262 = scmp.eq.s32.totalorder %s25, 0
      %p263 = por %p261, %p262
      %s265 = sadd.s32 %s264, 1
      %p268 = scmp.eq.s32.totalorder %s19, 3
      %p269 = scmp.ne.s32.totalorder %s264, %s266
      %p270 = scmp.eq.s32.totalorder %s19, 0
      %p271 = por %p269, %p270
      %p272 = scmp.ne.s32.totalorder %s264, %s266
      %p273 = scmp.eq.s32.totalorder %s24, 3
      %p274 = por %p272, %p273
      %p275 = scmp.ne.s32.totalorder %s266, %s267
      %p276 = scmp.eq.s32.totalorder %s24, 0
      %p277 = por %p275, %p276
      %p278 = scmp.ne.s32.totalorder %s266, %s267
      %p279 = scmp.eq.s32.totalorder %s25, 3
      %p280 = por %p278, %p279
      %p282 = scmp.ne.s32.totalorder %s267, %s281
      %p283 = scmp.eq.s32.totalorder %s25, 0
      %p284 = por %p282, %p283
      %p285 = scmp.le.s32.totalorder 1, %s19
      %p286 = scmp.lt.s32.totalorder %s19, 5
      %p287 = pnand %p285, %p286
      %p288 = pneg %p287
      // Predicated region
      $region9: #{tpu_custom_call.1} parent=5 // pred_check
        _
      $region10: #{tpu_custom_call.1} parent=5 // pred_check_branch
        %290 = sbr.rel (%p287) target = $region12
      $region11: #{tpu_custom_call.1} parent=5 // pred_region
        %s291 = ssub.s32 %s19, 1
        // Predicated region
        $region13: #{tpu_custom_call.1} parent=11 // pred_check
          %p292 = pneg %p52
        $region14: #{tpu_custom_call.1} parent=11 // pred_check_branch
          %294 = sbr.rel (%p292) target = $region16
        $region15: #{tpu_custom_call.1} parent=11 // pred_region
          _
        $region16: #{tpu_custom_call.1} parent=11 // pred_fallthru
          _
        // Predicated region
        $region17: #{tpu_custom_call.1} parent=11 // pred_check
          %p295 = pneg %p73
        $region18: #{tpu_custom_call.1} parent=11 // pred_check_branch
          %297 = sbr.rel (%p295) target = $region20
        $region19: #{tpu_custom_call.1} parent=11 // pred_region
          %s299 = ssub.s32 2048, 2048
          %300 = vsyncadd [#allocation6], %s299
          %s301 = sshll.u32 [#allocation5], 4
          %s302 = int_to_ptr.vmem [resolvable:$true] %s301
          %307 = dma.hbm_to_vmem [thread:$0]  %s1, 2048, %s302, [#allocation6], 64, 64, 4
        $region20: #{tpu_custom_call.1} parent=11 // pred_fallthru
          _
        // Predicated region
        $region21: #{tpu_custom_call.1} parent=11 // pred_check
          %p308 = pneg %p94
        $region22: #{tpu_custom_call.1} parent=11 // pred_check_branch
          %310 = sbr.rel (%p308) target = $region24
        $region23: #{tpu_custom_call.1} parent=11 // pred_region
          _
        $region24: #{tpu_custom_call.1} parent=11 // pred_fallthru
          _
        // Predicated region
        $region25: #{tpu_custom_call.1} parent=11 // pred_check
          %p311 = pneg %p115
        $region26: #{tpu_custom_call.1} parent=11 // pred_check_branch
          %313 = sbr.rel (%p311) target = $region28
        $region27: #{tpu_custom_call.1} parent=11 // pred_region
          %s315 = ssub.s32 2048, 2048
          %316 = vsyncadd [#allocation9], %s315
          %s317 = sshll.u32 [#allocation8], 4
          %s318 = int_to_ptr.vmem [resolvable:$true] %s317
          %323 = dma.hbm_to_vmem [thread:$0]  %s3, 2048, %s318, [#allocation9], 64, 64, 4
        $region28: #{tpu_custom_call.1} parent=11 // pred_fallthru
          _
        // Predicated region
        $region29: #{tpu_custom_call.1} parent=11 // pred_check
          %p324 = pneg %p136
        $region30: #{tpu_custom_call.1} parent=11 // pred_check_branch
          %326 = sbr.rel (%p324) target = $region32
        $region31: #{tpu_custom_call.1} parent=11 // pred_region
          _
        $region32: #{tpu_custom_call.1} parent=11 // pred_fallthru
          _
        // Predicated region
        $region33: #{tpu_custom_call.1} parent=11 // pred_check
          %p327 = pneg %p157
        $region34: #{tpu_custom_call.1} parent=11 // pred_check_branch
          %329 = sbr.rel (%p327) target = $region36
        $region35: #{tpu_custom_call.1} parent=11 // pred_region
          %s331 = ssub.s32 128, 128
          %332 = vsyncadd [#allocation9], %s331
          %s334 = sshll.u32 [#allocation10], 4
          %s335 = int_to_ptr.vmem [resolvable:$true] %s334
          %337 = dma.hbm_to_vmem [thread:$0]  %s5, 128, %s335, [#allocation9]
        $region36: #{tpu_custom_call.1} parent=11 // pred_fallthru
          _
        // Predicated region
        $region37: #{tpu_custom_call.1} parent=11 // pred_check
          %p338 = pneg %p256
        $region38: #{tpu_custom_call.1} parent=11 // pred_check_branch
          %340 = sbr.rel (%p338) target = $region40
        $region39: #{tpu_custom_call.1} parent=11 // pred_region
          _
        $region40: #{tpu_custom_call.1} parent=11 // pred_fallthru
          _
      $region12: #{tpu_custom_call.1} parent=5 // pred_fallthru
        _
      %p341 = scmp.lt.s32.totalorder %s19, 4
      // Predicated region
      $region41: #{tpu_custom_call.1} parent=5 // pred_check
        %p342 = pneg %p341
      $region42: #{tpu_custom_call.1} parent=5 // pred_check_branch
        %344 = sbr.rel (%p342) target = $region44
      $region43: #{tpu_custom_call.1} parent=5 // pred_region
        // Predicated region
        $region45: #{tpu_custom_call.1} parent=43 // pred_check
          %p345 = pneg %p177
        $region46: #{tpu_custom_call.1} parent=43 // pred_check_branch
          %347 = sbr.rel (%p345) target = $region48
        $region47: #{tpu_custom_call.1} parent=43 // pred_region
          %p348 = scmp.lt.s32.totalorder %s27, 1
          %s349 = scalar_select %p348, %s27, 1
          %s350 = smul.addr %s349, 8
          %s351 = scalar_lea.vmem %s6, %s350
        $region48: #{tpu_custom_call.1} parent=43 // pred_fallthru
          _
        // Predicated region
        $region49: #{tpu_custom_call.1} parent=43 // pred_check
          %p352 = pneg %p203
        $region50: #{tpu_custom_call.1} parent=43 // pred_check_branch
          %354 = sbr.rel (%p352) target = $region52
        $region51: #{tpu_custom_call.1} parent=43 // pred_region
          %s355 = smul.u32 16, %s27
          %p356 = scmp.lt.s32.totalorder %s355, 31
          %s357 = scalar_select %p356, %s355, 31
          %s358 = smul.addr %s357, 8
          %s359 = scalar_lea.vmem %s7, %s358
          %s360 = smul.u32 16, %s27
        $region52: #{tpu_custom_call.1} parent=43 // pred_fallthru
          _
        // Predicated region
        $region53: #{tpu_custom_call.1} parent=43 // pred_check
          %p361 = pneg %p229
        $region54: #{tpu_custom_call.1} parent=43 // pred_check_branch
          %363 = sbr.rel (%p361) target = $region56
        $region55: #{tpu_custom_call.1} parent=43 // pred_region
          %p364 = scmp.lt.s32.totalorder %s27, 1
          %s365 = scalar_select %p364, %s27, 1
          %s366 = smul.addr %s365, 8
          %s367 = scalar_lea.vmem %s8, %s366
        $region56: #{tpu_custom_call.1} parent=43 // pred_fallthru
          _
      $region44: #{tpu_custom_call.1} parent=5 // pred_fallthru
        _
      %p368 = scmp.le.s32.totalorder 1, %s19
      %p369 = scmp.lt.s32.totalorder %s19, 5
      %p370 = pnand %p368, %p369
      %p371 = pneg %p370
      // Predicated region
      $region57: #{tpu_custom_call.1} parent=5 // pred_check
        _
      $region58: #{tpu_custom_call.1} parent=5 // pred_check_branch
        %373 = sbr.rel (%p370) target = $region60
      $region59: #{tpu_custom_call.1} parent=5 // pred_region
        %s374 = ssub.s32 %s19, 1
        // Predicated region
        $region61: #{tpu_custom_call.1} parent=59 // pred_check
          %p375 = pneg %p73
        $region62: #{tpu_custom_call.1} parent=59 // pred_check_branch
          %377 = sbr.rel (%p375) target = $region64
        $region63: #{tpu_custom_call.1} parent=59 // pred_region
          %378 = dma.done [#allocation6], 2048
        $region64: #{tpu_custom_call.1} parent=59 // pred_fallthru
          _
        // Predicated region
        $region65: #{tpu_custom_call.1} parent=59 // pred_check
          %p379 = pneg %p115
        $region66: #{tpu_custom_call.1} parent=59 // pred_check_branch
          %381 = sbr.rel (%p379) target = $region68
        $region67: #{tpu_custom_call.1} parent=59 // pred_region
          %382 = dma.done [#allocation9], 2048
        $region68: #{tpu_custom_call.1} parent=59 // pred_fallthru
          _
        // Predicated region
        $region69: #{tpu_custom_call.1} parent=59 // pred_check
          %p383 = pneg %p157
        $region70: #{tpu_custom_call.1} parent=59 // pred_check_branch
          %385 = sbr.rel (%p383) target = $region72
        $region71: #{tpu_custom_call.1} parent=59 // pred_region
          %386 = dma.done [#allocation9], 128
        $region72: #{tpu_custom_call.1} parent=59 // pred_fallthru
          _
        %p387 = pneg %p52
        %p388 = pneg %p49
        %p389 = pneg %p73
        %p390 = pneg %p70
        %p391 = pneg %p94
        %p392 = pneg %p91
        %p393 = pneg %p115
        %p394 = pneg %p112
        %p395 = pneg %p136
        %p396 = pneg %p133
        %p397 = pneg %p157
        %p398 = pneg %p154
        %p399 = scmp.lt.s32.totalorder %s29, 1
        %s400 = scalar_select %p399, %s29, 1
        %s401 = smul.addr %s400, 8
        %s402 = scalar_lea.vmem %s6, %s401
        %p403 = pneg %p183
        %p404 = pneg %p180
        %s405 = smul.u32 16, %s29
        %p406 = scmp.lt.s32.totalorder %s405, 31
        %s407 = scalar_select %p406, %s405, 31
        %s408 = smul.addr %s407, 8
        %s409 = scalar_lea.vmem %s7, %s408
        %p410 = pneg %p209
        %p411 = pneg %p206
        %p412 = scmp.lt.s32.totalorder %s29, 1
        %s413 = scalar_select %p412, %s29, 1
        %s414 = smul.addr %s413, 8
        %s415 = scalar_lea.vmem %s8, %s414
        %p416 = pneg %p235
        %p417 = pneg %p232
        %p418 = pneg %p256
        %p419 = pneg %p253
        %p420 = pneg %p277
        %p421 = pneg %p274
        %p422 = scmp.lt.s32.totalorder %s29, 1
        %s423 = scalar_select %p422, %s29, 1
        %s424 = smul.addr %s423, 8
        %s425 = scalar_lea.vmem %s6, %s424
        %s426 = smul.u32 16, %s29
        %p427 = scmp.lt.s32.totalorder %s426, 31
        %s428 = scalar_select %p427, %s426, 31
        %s429 = smul.addr %s428, 8
        %s430 = scalar_lea.vmem %s7, %s429
        %s431 = smul.u32 16, %s29
        %p432 = scmp.lt.s32.totalorder %s29, 1
        %s433 = scalar_select %p432, %s29, 1
        %s434 = smul.addr %s433, 8
        %s435 = scalar_lea.vmem %s8, %s434
        %s437 = smul.u32 %s29, 128
        %p438 = scmp.eq.s32.totalorder %s28, 0
        // Predicated region
        $region73: #{tpu_custom_call.1} parent=59 // pred_check
          %p439 = pneg %p438
        $region74: #{tpu_custom_call.1} parent=59 // pred_check_branch
          %441 = sbr.rel (%p439) target = $region76
        $region75: #{tpu_custom_call.1} parent=59 // pred_region
          %p442 = scmp.eq.s32.totalorder %s29, 0
          // Predicated region
          $region77: #{tpu_custom_call.1} parent=75 // pred_check
            %p443 = pneg %p442
          $region78: #{tpu_custom_call.1} parent=75 // pred_check_branch
            %445 = sbr.rel (%p443) target = $region80
          $region79: #{tpu_custom_call.1} parent=75 // pred_region
            %446 = vst [vmem:[#allocation3] sm:$0xff] 0.0
          $region80: #{tpu_custom_call.1} parent=75 // pred_fallthru
            _
          %s447 = sshra.s32 %s437, 3
          %s448 = sand.u32 %s437, 7
          %s449 = smul.u32 %s447, 2
          %s450 = smul.addr %s449, 4
          %s451 = scalar_lea.vmem %s0, %s450
          %v452 = vld [vmem:[%s451] sm:$0xff]
          %v453 = vld [vmem:[%s451 + $0x8] sm:$0xff]
          %v454 = vld [vmem:[%s451 + $0x10] sm:$0xff]
          %v455 = vld [vmem:[%s451 + $0x18] sm:$0xff]
          %v456 = vld [vmem:[%s451 + $0x20] sm:$0xff]
          %v457 = vld [vmem:[%s451 + $0x28] sm:$0xff]
          %v458 = vld [vmem:[%s451 + $0x30] sm:$0xff]
          %v459 = vld [vmem:[%s451 + $0x38] sm:$0xff]
          %v460 = vld [vmem:[%s451 + $0x40] sm:$0xff]
          %v461 = vld [vmem:[%s451 + $0x48] sm:$0xff]
          %v462 = vld [vmem:[%s451 + $0x50] sm:$0xff]
          %v463 = vld [vmem:[%s451 + $0x58] sm:$0xff]
          %v464 = vld [vmem:[%s451 + $0x60] sm:$0xff]
          %v465 = vld [vmem:[%s451 + $0x68] sm:$0xff]
          %v466 = vld [vmem:[%s451 + $0x70] sm:$0xff]
          %v467 = vld [vmem:[%s451 + $0x78] sm:$0xff]
          %v468 = vld [vmem:[#allocation5] sm:$0xf]
          %v469 = vld [vmem:[#allocation5 + $0x4] sm:$0xf]
          %v470 = vld [vmem:[#allocation5 + $0x8] sm:$0xf]
          %v471 = vld [vmem:[#allocation5 + $0xc] sm:$0xf]
          %v472 = vld [vmem:[#allocation5 + $0x10] sm:$0xf]
          %v473 = vld [vmem:[#allocation5 + $0x14] sm:$0xf]
          %v474 = vld [vmem:[#allocation5 + $0x18] sm:$0xf]
          %v475 = vld [vmem:[#allocation5 + $0x1c] sm:$0xf]
          %v476 = vld [vmem:[#allocation5 + $0x20] sm:$0xf]
          %v477 = vld [vmem:[#allocation5 + $0x24] sm:$0xf]
          %v478 = vld [vmem:[#allocation5 + $0x28] sm:$0xf]
          %v479 = vld [vmem:[#allocation5 + $0x2c] sm:$0xf]
          %v480 = vld [vmem:[#allocation5 + $0x30] sm:$0xf]
          %v481 = vld [vmem:[#allocation5 + $0x34] sm:$0xf]
          %v482 = vld [vmem:[#allocation5 + $0x38] sm:$0xf]
          %v483 = vld [vmem:[#allocation5 + $0x3c] sm:$0xf]
          %v484 = vld [vmem:[#allocation5 + $0x40] sm:$0xf]
          %v485 = vld [vmem:[#allocation5 + $0x44] sm:$0xf]
          %v486 = vld [vmem:[#allocation5 + $0x48] sm:$0xf]
          %v487 = vld [vmem:[#allocation5 + $0x4c] sm:$0xf]
          %v488 = vld [vmem:[#allocation5 + $0x50] sm:$0xf]
          %v489 = vld [vmem:[#allocation5 + $0x54] sm:$0xf]
          %v490 = vld [vmem:[#allocation5 + $0x58] sm:$0xf]
          %v491 = vld [vmem:[#allocation5 + $0x5c] sm:$0xf]
          %v492 = vld [vmem:[#allocation5 + $0x60] sm:$0xf]
          %v493 = vld [vmem:[#allocation5 + $0x64] sm:$0xf]
          %v494 = vld [vmem:[#allocation5 + $0x68] sm:$0xf]
          %v495 = vld [vmem:[#allocation5 + $0x6c] sm:$0xf]
          %v496 = vld [vmem:[#allocation5 + $0x70] sm:$0xf]
          %v497 = vld [vmem:[#allocation5 + $0x74] sm:$0xf]
          %v498 = vld [vmem:[#allocation5 + $0x78] sm:$0xf]
          %v499 = vld [vmem:[#allocation5 + $0x7c] sm:$0xf]
          %v500 = vld [vmem:[%s2] sm:$0x1]
          %v502 = vlaneseq
          %v503 = vshrl.u32 %v502, 7
          %v504 = vsub.s32 0, %v503
          %v505 = vrot.slane %v500, %v504
          %v523 = vunpack.c.l.b16 %v452
          %v524 = vunpack.c.h.b16 %v452
          %v525 = vunpack.c.l.b16 %v453
          %v526 = vunpack.c.h.b16 %v453
          %v527 = vunpack.c.l.b16 %v454
          %v528 = vunpack.c.h.b16 %v454
          %v529 = vunpack.c.l.b16 %v455
          %v530 = vunpack.c.h.b16 %v455
          %v531 = vunpack.c.l.b16 %v456
          %v532 = vunpack.c.h.b16 %v456
          %v533 = vunpack.c.l.b16 %v457
          %v534 = vunpack.c.h.b16 %v457
          %v535 = vunpack.c.l.b16 %v458
          %v536 = vunpack.c.h.b16 %v458
          %v537 = vunpack.c.l.b16 %v459
          %v538 = vunpack.c.h.b16 %v459
          %v539 = vunpack.c.l.b16 %v460
          %v540 = vunpack.c.h.b16 %v460
          %v541 = vunpack.c.l.b16 %v461
          %v542 = vunpack.c.h.b16 %v461
          %v543 = vunpack.c.l.b16 %v462
          %v544 = vunpack.c.h.b16 %v462
          %v545 = vunpack.c.l.b16 %v463
          %v546 = vunpack.c.h.b16 %v463
          %v547 = vunpack.c.l.b16 %v464
          %v548 = vunpack.c.h.b16 %v464
          %v549 = vunpack.c.l.b16 %v465
          %v550 = vunpack.c.h.b16 %v465
          %v551 = vunpack.c.l.b16 %v466
          %v552 = vunpack.c.h.b16 %v466
          %v553 = vunpack.c.l.b16 %v467
          %v554 = vunpack.c.h.b16 %v467
          %v555 = vpack.c.b16 %v525, %v523
          %v556 = vpack.c.b16 %v526, %v524
          %v557 = vpack.c.b16 %v529, %v527
          %v558 = vpack.c.b16 %v530, %v528
          %v559 = vpack.c.b16 %v533, %v531
          %v560 = vpack.c.b16 %v534, %v532
          %v561 = vpack.c.b16 %v537, %v535
          %v562 = vpack.c.b16 %v538, %v536
          %v563 = vpack.c.b16 %v541, %v539
          %v564 = vpack.c.b16 %v542, %v540
          %v565 = vpack.c.b16 %v545, %v543
          %v566 = vpack.c.b16 %v546, %v544
          %v567 = vpack.c.b16 %v549, %v547
          %v568 = vpack.c.b16 %v550, %v548
          %v569 = vpack.c.b16 %v553, %v551
          %v570 = vpack.c.b16 %v554, %v552
          %v619 = vunpack.c.l.b16 %v468
          %v620 = vunpack.c.l.b16 %v469
          %v621 = vunpack.c.l.b16 %v470
          %v622 = vunpack.c.l.b16 %v471
          %v623 = vunpack.c.l.b16 %v472
          %v624 = vunpack.c.l.b16 %v473
          %v625 = vunpack.c.l.b16 %v474
          %v626 = vunpack.c.l.b16 %v475
          %v627 = vunpack.c.l.b16 %v476
          %v628 = vunpack.c.l.b16 %v477
          %v629 = vunpack.c.l.b16 %v478
          %v630 = vunpack.c.l.b16 %v479
          %v631 = vunpack.c.l.b16 %v480
          %v632 = vunpack.c.l.b16 %v481
          %v633 = vunpack.c.l.b16 %v482
          %v634 = vunpack.c.l.b16 %v483
          %v635 = vunpack.c.l.b16 %v484
          %v636 = vunpack.c.l.b16 %v485
          %v637 = vunpack.c.l.b16 %v486
          %v638 = vunpack.c.l.b16 %v487
          %v639 = vunpack.c.l.b16 %v488
          %v640 = vunpack.c.l.b16 %v489
          %v641 = vunpack.c.l.b16 %v490
          %v642 = vunpack.c.l.b16 %v491
          %v643 = vunpack.c.l.b16 %v492
          %v644 = vunpack.c.l.b16 %v493
          %v645 = vunpack.c.l.b16 %v494
          %v646 = vunpack.c.l.b16 %v495
          %v647 = vunpack.c.l.b16 %v496
          %v648 = vunpack.c.l.b16 %v497
          %v649 = vunpack.c.l.b16 %v498
          %v650 = vunpack.c.l.b16 %v499
          %v651 = vpack.c.b16 %v620, %v619
          %v652 = vpack.c.b16 %v622, %v621
          %v653 = vpack.c.b16 %v624, %v623
          %v654 = vpack.c.b16 %v626, %v625
          %v655 = vpack.c.b16 %v628, %v627
          %v656 = vpack.c.b16 %v630, %v629
          %v657 = vpack.c.b16 %v632, %v631
          %v658 = vpack.c.b16 %v634, %v633
          %v659 = vpack.c.b16 %v636, %v635
          %v660 = vpack.c.b16 %v638, %v637
          %v661 = vpack.c.b16 %v640, %v639
          %v662 = vpack.c.b16 %v642, %v641
          %v663 = vpack.c.b16 %v644, %v643
          %v664 = vpack.c.b16 %v646, %v645
          %v665 = vpack.c.b16 %v648, %v647
          %v666 = vpack.c.b16 %v650, %v649
          %683 = vmatprep.subr.bf16.mxu0 0
          %684 = vmatpush1.bf16.msra.mxu0 %v651
          %685 = vmatprep.subr.bf16.mxu0 0
          %686 = vmatpush1.bf16.msra.mxu0 %v652
          %687 = vmatprep.subr.bf16.mxu0 0
          %688 = vmatpush1.bf16.msra.mxu0 %v653
          %689 = vmatprep.subr.bf16.mxu0 0
          %690 = vmatpush1.bf16.msra.mxu0 %v654
          %691 = vmatprep.subr.bf16.mxu0 0
          %692 = vmatpush1.bf16.msra.mxu0 %v655
          %693 = vmatprep.subr.bf16.mxu0 0
          %694 = vmatpush1.bf16.msra.mxu0 %v656
          %695 = vmatprep.subr.bf16.mxu0 0
          %696 = vmatpush1.bf16.msra.mxu0 %v657
          %697 = vmatprep.subr.bf16.mxu0 0
          %698 = vmatpush1.bf16.msra.mxu0 %v658
          %699 = vmatprep.subr.bf16.mxu0 0
          %700 = vmatpush1.bf16.msra.mxu0 %v659
          %701 = vmatprep.subr.bf16.mxu0 0
          %702 = vmatpush1.bf16.msra.mxu0 %v660
          %703 = vmatprep.subr.bf16.mxu0 0
          %704 = vmatpush1.bf16.msra.mxu0 %v661
          %705 = vmatprep.subr.bf16.mxu0 0
          %706 = vmatpush1.bf16.msra.mxu0 %v662
          %707 = vmatprep.subr.bf16.mxu0 0
          %708 = vmatpush1.bf16.msra.mxu0 %v663
          %709 = vmatprep.subr.bf16.mxu0 0
          %710 = vmatpush1.bf16.msra.mxu0 %v664
          %711 = vmatprep.subr.bf16.mxu0 0
          %712 = vmatpush1.bf16.msra.mxu0 %v665
          %713 = vmatprep.subr.bf16.mxu0 0
          %714 = vmatpush1.bf16.msra.mxu0 %v666
          %715 = vmatprep.mubr.bf16.mxu0 %v556
          %716 = vmatmul.mubr.bf16.gmra.mrb[0].mxu0 %v555
          %v717 = vpop.f32.mrb[0].mxu0
          %v718 = vadd.f32 %v505, %v717
          %v719 = vpop.f32.mrb[0].mxu0
          %v720 = vpop.f32.mrb[0].mxu0
          %v721 = vadd.f32 %v505, %v720
          %v722 = vpop.f32.mrb[0].mxu0
          %723 = vmatprep.mubr.bf16.mxu0 %v558
          %724 = vmatmul.mubr.bf16.gmra.mrb[0].mxu0 %v557
          %v725 = vpop.f32.mrb[0].mxu0
          %v726 = vadd.f32 %v505, %v725
          %v727 = vpop.f32.mrb[0].mxu0
          %v728 = vpop.f32.mrb[0].mxu0
          %v729 = vadd.f32 %v505, %v728
          %v730 = vpop.f32.mrb[0].mxu0
          %731 = vmatprep.mubr.bf16.mxu0 %v560
          %732 = vmatmul.mubr.bf16.gmra.mrb[0].mxu0 %v559
          %v733 = vpop.f32.mrb[0].mxu0
          %v734 = vadd.f32 %v505, %v733
          %v735 = vpop.f32.mrb[0].mxu0
          %v736 = vpop.f32.mrb[0].mxu0
          %v737 = vadd.f32 %v505, %v736
          %v738 = vpop.f32.mrb[0].mxu0
          %739 = vmatprep.mubr.bf16.mxu0 %v562
          %740 = vmatmul.mubr.bf16.gmra.mrb[0].mxu0 %v561
          %v741 = vpop.f32.mrb[0].mxu0
          %v742 = vadd.f32 %v505, %v741
          %v743 = vpop.f32.mrb[0].mxu0
          %v744 = vpop.f32.mrb[0].mxu0
          %v745 = vadd.f32 %v505, %v744
          %v746 = vpop.f32.mrb[0].mxu0
          %747 = vmatprep.mubr.bf16.mxu0 %v564
          %748 = vmatmul.mubr.bf16.gmra.mrb[0].mxu0 %v563
          %v749 = vpop.f32.mrb[0].mxu0
          %v750 = vadd.f32 %v505, %v749
          %v751 = vpop.f32.mrb[0].mxu0
          %v752 = vpop.f32.mrb[0].mxu0
          %v753 = vadd.f32 %v505, %v752
          %v754 = vpop.f32.mrb[0].mxu0
          %755 = vmatprep.mubr.bf16.mxu0 %v566
          %756 = vmatmul.mubr.bf16.gmra.mrb[0].mxu0 %v565
          %v757 = vpop.f32.mrb[0].mxu0
          %v758 = vadd.f32 %v505, %v757
          %v759 = vpop.f32.mrb[0].mxu0
          %v760 = vpop.f32.mrb[0].mxu0
          %v761 = vadd.f32 %v505, %v760
          %v762 = vpop.f32.mrb[0].mxu0
          %763 = vmatprep.mubr.bf16.mxu0 %v568
          %764 = vmatmul.mubr.bf16.gmra.mrb[0].mxu0 %v567
          %v765 = vpop.f32.mrb[0].mxu0
          %v766 = vadd.f32 %v505, %v765
          %v767 = vpop.f32.mrb[0].mxu0
          %v768 = vpop.f32.mrb[0].mxu0
          %v769 = vadd.f32 %v505, %v768
          %v770 = vpop.f32.mrb[0].mxu0
          %771 = vmatprep.mubr.bf16.mxu0 %v570
          %772 = vmatmul.mubr.bf16.gmra.mrb[0].mxu0 %v569
          %v773 = vpop.f32.mrb[0].mxu0
          %v774 = vadd.f32 %v505, %v773
          %v775 = vpop.f32.mrb[0].mxu0
          %v776 = vpop.f32.mrb[0].mxu0
          %v777 = vadd.f32 %v505, %v776
          %v778 = vpop.f32.mrb[0].mxu0
          %779 = vdwg.mxu0
          %v780 = vld [vmem:[#allocation3] sm:$0xff]
          %v781 = vld [vmem:[%s425] sm:$0xff]
          %782 = vmatprep.subr.mxu0 0.0
          %783 = vmatpush1.msra.mxu0 %v718
          %784 = vmatprep.subr.mxu0 0.0
          %785 = vmatpush1.msra.mxu0 %v721
          %786 = vmatprep.subr.mxu0 0.0
          %787 = vmatpush1.msra.mxu0 %v726
          %788 = vmatprep.subr.mxu0 0.0
          %789 = vmatpush1.msra.mxu0 %v729
          %790 = vmatprep.subr.mxu0 0.0
          %791 = vmatpush1.msra.mxu0 %v734
          %792 = vmatprep.subr.mxu0 0.0
          %793 = vmatpush1.msra.mxu0 %v737
          %794 = vmatprep.subr.mxu0 0.0
          %795 = vmatpush1.msra.mxu0 %v742
          %796 = vmatprep.subr.mxu0 0.0
          %797 = vmatpush1.msra.mxu0 %v745
          %798 = vmatprep.subr.mxu0 0.0
          %799 = vmatpush1.msra.mxu0 %v750
          %800 = vmatprep.subr.mxu0 0.0
          %801 = vmatpush1.msra.mxu0 %v753
          %802 = vmatprep.subr.mxu0 0.0
          %803 = vmatpush1.msra.mxu0 %v758
          %804 = vmatprep.subr.mxu0 0.0
          %805 = vmatpush1.msra.mxu0 %v761
          %806 = vmatprep.subr.mxu0 0.0
          %807 = vmatpush1.msra.mxu0 %v766
          %808 = vmatprep.subr.mxu0 0.0
          %809 = vmatpush1.msra.mxu0 %v769
          %810 = vmatprep.subr.mxu0 0.0
          %811 = vmatpush1.msra.mxu0 %v774
          %812 = vmatprep.subr.mxu0 0.0
          %813 = vmatpush1.msra.mxu0 %v777
          %814 = vmatprep.subr.mxu0 0.0
          %815 = vmatpush1.msra.mxu0 0.0
          %816 = vmatprep.subr.mxu0 0.0
          %817 = vmatpush1.msra.mxu0 0.0
          %818 = vmatprep.subr.mxu0 0.0
          %819 = vmatpush1.msra.mxu0 0.0
          %820 = vmatprep.subr.mxu0 0.0
          %821 = vmatpush1.msra.mxu0 0.0
          %822 = vmatprep.subr.mxu0 0.0
          %823 = vmatpush1.msra.mxu0 0.0
          %824 = vmatprep.subr.mxu0 0.0
          %825 = vmatpush1.msra.mxu0 0.0
          %826 = vmatprep.subr.mxu0 0.0
          %827 = vmatpush1.msra.mxu0 0.0
          %828 = vmatprep.subr.mxu0 0.0
          %829 = vmatpush1.msra.mxu0 0.0
          %830 = vmatprep.subr.mxu0 0.0
          %831 = vmatpush1.msra.mxu0 0.0
          %832 = vmatprep.subr.mxu0 0.0
          %833 = vmatpush1.msra.mxu0 0.0
          %834 = vmatprep.subr.mxu0 0.0
          %835 = vmatpush1.msra.mxu0 0.0
          %836 = vmatprep.subr.mxu0 0.0
          %837 = vmatpush1.msra.mxu0 0.0
          %838 = vmatprep.subr.mxu0 0.0
          %839 = vmatpush1.msra.mxu0 0.0
          %840 = vmatprep.subr.mxu0 0.0
          %841 = vmatpush1.msra.mxu0 0.0
          %842 = vmatprep.subr.mxu0 0.0
          %843 = vmatpush1.msra.mxu0 0.0
          %844 = vmatprep.subr.mxu0 0.0
          %845 = vmatpush1.msra.mxu0 0.0
          %846 = vmatprep.mubr.f32.mxu0 0.0
          %847 = vmatmul.mubr.f32.gmra.mrb[0].mxu0 %v781
          %v848 = vpop.f32.mrb[0].mxu0
          %v849 = vadd.f32 0.0, %v848
          %v850 = vpop.f32.mrb[0].mxu0
          %851 = vdwg.mxu0
          %v852 = vadd.f32 %v780, %v849
          %853 = vst [vmem:[#allocation3] sm:$0xff] %v852
          %v854 = vmax.f32 %v718, 0.0
          %v855 = vmax.f32 %v721, 0.0
          %v856 = vmax.f32 %v726, 0.0
          %v857 = vmax.f32 %v729, 0.0
          %v858 = vmax.f32 %v734, 0.0
          %v859 = vmax.f32 %v737, 0.0
          %v860 = vmax.f32 %v742, 0.0
          %v861 = vmax.f32 %v745, 0.0
          %v862 = vmax.f32 %v750, 0.0
          %v863 = vmax.f32 %v753, 0.0
          %v864 = vmax.f32 %v758, 0.0
          %v865 = vmax.f32 %v761, 0.0
          %v866 = vmax.f32 %v766, 0.0
          %v867 = vmax.f32 %v769, 0.0
          %v868 = vmax.f32 %v774, 0.0
          %v869 = vmax.f32 %v777, 0.0
          %v870 = vpack.c.bf16 %v855, %v854
          %v871 = vpack.c.bf16 %v857, %v856
          %v872 = vpack.c.bf16 %v859, %v858
          %v873 = vpack.c.bf16 %v861, %v860
          %v874 = vpack.c.bf16 %v863, %v862
          %v875 = vpack.c.bf16 %v865, %v864
          %v876 = vpack.c.bf16 %v867, %v866
          %v877 = vpack.c.bf16 %v869, %v868
          %v878 = vld [vmem:[%s430] sm:$0xff]
          %v879 = vld [vmem:[%s430 + $0x8] sm:$0xff]
          %v880 = vld [vmem:[%s430 + $0x10] sm:$0xff]
          %v881 = vld [vmem:[%s430 + $0x18] sm:$0xff]
          %v882 = vld [vmem:[%s430 + $0x20] sm:$0xff]
          %v883 = vld [vmem:[%s430 + $0x28] sm:$0xff]
          %v884 = vld [vmem:[%s430 + $0x30] sm:$0xff]
          %v885 = vld [vmem:[%s430 + $0x38] sm:$0xff]
          %v886 = vld [vmem:[%s430 + $0x40] sm:$0xff]
          %v887 = vld [vmem:[%s430 + $0x48] sm:$0xff]
          %v888 = vld [vmem:[%s430 + $0x50] sm:$0xff]
          %v889 = vld [vmem:[%s430 + $0x58] sm:$0xff]
          %v890 = vld [vmem:[%s430 + $0x60] sm:$0xff]
          %v891 = vld [vmem:[%s430 + $0x68] sm:$0xff]
          %v892 = vld [vmem:[%s430 + $0x70] sm:$0xff]
          %v893 = vld [vmem:[%s430 + $0x78] sm:$0xff]
          %v894 = vld [vmem:[#allocation10] sm:$0xff]
          %vm895 = vcmask 64512
          %v897 = vsel %vm895, %v878, 0
          %v900 = vsel %vm895, %v879, 0
          %v903 = vsel %vm895, %v880, 0
          %v906 = vsel %vm895, %v881, 0
          %v909 = vsel %vm895, %v882, 0
          %v912 = vsel %vm895, %v883, 0
          %v915 = vsel %vm895, %v884, 0
          %v918 = vsel %vm895, %v885, 0
          %v921 = vsel %vm895, %v886, 0
          %v924 = vsel %vm895, %v887, 0
          %v927 = vsel %vm895, %v888, 0
          %v930 = vsel %vm895, %v889, 0
          %v933 = vsel %vm895, %v890, 0
          %v936 = vsel %vm895, %v891, 0
          %v939 = vsel %vm895, %v892, 0
          %v942 = vsel %vm895, %v893, 0
          %944 = vmatprep.subr.mxu0 0.0
          %945 = vmatpush1.msra.mxu0 %v894
          %946 = vmatprep.subr.mxu0 0.0
          %947 = vmatpush1.msra.mxu0 0.0
          %948 = vmatprep.subr.mxu0 0.0
          %949 = vmatpush1.msra.mxu0 0.0
          %950 = vmatprep.subr.mxu0 0.0
          %951 = vmatpush1.msra.mxu0 0.0
          %952 = vmatprep.subr.mxu0 0.0
          %953 = vmatpush1.msra.mxu0 0.0
          %954 = vmatprep.subr.mxu0 0.0
          %955 = vmatpush1.msra.mxu0 0.0
          %956 = vmatprep.subr.mxu0 0.0
          %957 = vmatpush1.msra.mxu0 0.0
          %958 = vmatprep.subr.mxu0 0.0
          %959 = vmatpush1.msra.mxu0 0.0
          %960 = vmatprep.subr.mxu0 0.0
          %961 = vmatpush1.msra.mxu0 0.0
          %962 = vmatprep.subr.mxu0 0.0
          %963 = vmatpush1.msra.mxu0 0.0
          %964 = vmatprep.subr.mxu0 0.0
          %965 = vmatpush1.msra.mxu0 0.0
          %966 = vmatprep.subr.mxu0 0.0
          %967 = vmatpush1.msra.mxu0 0.0
          %968 = vmatprep.subr.mxu0 0.0
          %969 = vmatpush1.msra.mxu0 0.0
          %970 = vmatprep.subr.mxu0 0.0
          %971 = vmatpush1.msra.mxu0 0.0
          %972 = vmatprep.subr.mxu0 0.0
          %973 = vmatpush1.msra.mxu0 0.0
          %974 = vmatprep.subr.mxu0 0.0
          %975 = vmatpush1.msra.mxu0 0.0
          %976 = vmatprep.subr.mxu0 0.0
          %977 = vmatpush1.msra.mxu0 0.0
          %978 = vmatprep.subr.mxu0 0.0
          %979 = vmatpush1.msra.mxu0 0.0
          %980 = vmatprep.subr.mxu0 0.0
          %981 = vmatpush1.msra.mxu0 0.0
          %982 = vmatprep.subr.mxu0 0.0
          %983 = vmatpush1.msra.mxu0 0.0
          %984 = vmatprep.subr.mxu0 0.0
          %985 = vmatpush1.msra.mxu0 0.0
          %986 = vmatprep.subr.mxu0 0.0
          %987 = vmatpush1.msra.mxu0 0.0
          %988 = vmatprep.subr.mxu0 0.0
          %989 = vmatpush1.msra.mxu0 0.0
          %990 = vmatprep.subr.mxu0 0.0
          %991 = vmatpush1.msra.mxu0 0.0
          %992 = vmatprep.subr.mxu0 0.0
          %993 = vmatpush1.msra.mxu0 0.0
          %994 = vmatprep.subr.mxu0 0.0
          %995 = vmatpush1.msra.mxu0 0.0
          %996 = vmatprep.subr.mxu0 0.0
          %997 = vmatpush1.msra.mxu0 0.0
          %998 = vmatprep.subr.mxu0 0.0
          %999 = vmatpush1.msra.mxu0 0.0
          %1000 = vmatprep.subr.mxu0 0.0
          %1001 = vmatpush1.msra.mxu0 0.0
          %1002 = vmatprep.subr.mxu0 0.0
          %1003 = vmatpush1.msra.mxu0 0.0
          %1004 = vmatprep.subr.mxu0 0.0
          %1005 = vmatpush1.msra.mxu0 0.0
          %1006 = vmatprep.subr.mxu0 0.0
          %1007 = vmatpush1.msra.mxu0 0.0
          %1008 = vmatprep.mubr.f32.mxu0 0.0
          %1009 = vmatmul.mubr.f32.gmra.mrb[0].mxu0 %v897
          %v1010 = vpop.f32.mrb[0].mxu0
          %v1011 = vadd.f32 0.0, %v1010
          %v1012 = vpop.f32.mrb[0].mxu0
          %1013 = vmatprep.mubr.f32.mxu0 0.0
          %1014 = vmatmul.mubr.f32.gmra.mrb[0].mxu0 %v900
          %v1015 = vpop.f32.mrb[0].mxu0
          %v1016 = vadd.f32 0.0, %v1015
          %v1017 = vpop.f32.mrb[0].mxu0
          %1018 = vmatprep.mubr.f32.mxu0 0.0
          %1019 = vmatmul.mubr.f32.gmra.mrb[0].mxu0 %v903
          %v1020 = vpop.f32.mrb[0].mxu0
          %v1021 = vadd.f32 0.0, %v1020
          %v1022 = vpop.f32.mrb[0].mxu0
          %1023 = vmatprep.mubr.f32.mxu0 0.0
          %1024 = vmatmul.mubr.f32.gmra.mrb[0].mxu0 %v906
          %v1025 = vpop.f32.mrb[0].mxu0
          %v1026 = vadd.f32 0.0, %v1025
          %v1027 = vpop.f32.mrb[0].mxu0
          %1028 = vmatprep.mubr.f32.mxu0 0.0
          %1029 = vmatmul.mubr.f32.gmra.mrb[0].mxu0 %v909
          %v1030 = vpop.f32.mrb[0].mxu0
          %v1031 = vadd.f32 0.0, %v1030
          %v1032 = vpop.f32.mrb[0].mxu0
          %1033 = vmatprep.mubr.f32.mxu0 0.0
          %1034 = vmatmul.mubr.f32.gmra.mrb[0].mxu0 %v912
          %v1035 = vpop.f32.mrb[0].mxu0
          %v1036 = vadd.f32 0.0, %v1035
          %v1037 = vpop.f32.mrb[0].mxu0
          %1038 = vmatprep.mubr.f32.mxu0 0.0
          %1039 = vmatmul.mubr.f32.gmra.mrb[0].mxu0 %v915
          %v1040 = vpop.f32.mrb[0].mxu0
          %v1041 = vadd.f32 0.0, %v1040
          %v1042 = vpop.f32.mrb[0].mxu0
          %1043 = vmatprep.mubr.f32.mxu0 0.0
          %1044 = vmatmul.mubr.f32.gmra.mrb[0].mxu0 %v918
          %v1045 = vpop.f32.mrb[0].mxu0
          %v1046 = vadd.f32 0.0, %v1045
          %v1047 = vpop.f32.mrb[0].mxu0
          %1048 = vmatprep.mubr.f32.mxu0 0.0
          %1049 = vmatmul.mubr.f32.gmra.mrb[0].mxu0 %v921
          %v1050 = vpop.f32.mrb[0].mxu0
          %v1051 = vadd.f32 0.0, %v1050
          %v1052 = vpop.f32.mrb[0].mxu0
          %1053 = vmatprep.mubr.f32.mxu0 0.0
          %1054 = vmatmul.mubr.f32.gmra.mrb[0].mxu0 %v924
          %v1055 = vpop.f32.mrb[0].mxu0
          %v1056 = vadd.f32 0.0, %v1055
          %v1057 = vpop.f32.mrb[0].mxu0
          %1058 = vmatprep.mubr.f32.mxu0 0.0
          %1059 = vmatmul.mubr.f32.gmra.mrb[0].mxu0 %v927
          %v1060 = vpop.f32.mrb[0].mxu0
          %v1061 = vadd.f32 0.0, %v1060
          %v1062 = vpop.f32.mrb[0].mxu0
          %1063 = vmatprep.mubr.f32.mxu0 0.0
          %1064 = vmatmul.mubr.f32.gmra.mrb[0].mxu0 %v930
          %v1065 = vpop.f32.mrb[0].mxu0
          %v1066 = vadd.f32 0.0, %v1065
          %v1067 = vpop.f32.mrb[0].mxu0
          %1068 = vmatprep.mubr.f32.mxu0 0.0
          %1069 = vmatmul.mubr.f32.gmra.mrb[0].mxu0 %v933
          %v1070 = vpop.f32.mrb[0].mxu0
          %v1071 = vadd.f32 0.0, %v1070
          %v1072 = vpop.f32.mrb[0].mxu0
          %1073 = vmatprep.mubr.f32.mxu0 0.0
          %1074 = vmatmul.mubr.f32.gmra.mrb[0].mxu0 %v936
          %v1075 = vpop.f32.mrb[0].mxu0
          %v1076 = vadd.f32 0.0, %v1075
          %v1077 = vpop.f32.mrb[0].mxu0
          %1078 = vmatprep.mubr.f32.mxu0 0.0
          %1079 = vmatmul.mubr.f32.gmra.mrb[0].mxu0 %v939
          %v1080 = vpop.f32.mrb[0].mxu0
          %v1081 = vadd.f32 0.0, %v1080
          %v1082 = vpop.f32.mrb[0].mxu0
          %1083 = vmatprep.mubr.f32.mxu0 0.0
          %1084 = vmatmul.mubr.f32.gmra.mrb[0].mxu0 %v942
          %v1085 = vpop.f32.mrb[0].mxu0
          %v1086 = vadd.f32 0.0, %v1085
          %v1087 = vpop.f32.mrb[0].mxu0
          %1088 = vdwg.mxu0
          %v1089 = vmax.f32 %v1011, 0.0
          %v1090 = vmax.f32 %v1016, 0.0
          %v1091 = vmax.f32 %v1021, 0.0
          %v1092 = vmax.f32 %v1026, 0.0
          %v1093 = vmax.f32 %v1031, 0.0
          %v1094 = vmax.f32 %v1036, 0.0
          %v1095 = vmax.f32 %v1041, 0.0
          %v1096 = vmax.f32 %v1046, 0.0
          %v1097 = vmax.f32 %v1051, 0.0
          %v1098 = vmax.f32 %v1056, 0.0
          %v1099 = vmax.f32 %v1061, 0.0
          %v1100 = vmax.f32 %v1066, 0.0
          %v1101 = vmax.f32 %v1071, 0.0
          %v1102 = vmax.f32 %v1076, 0.0
          %v1103 = vmax.f32 %v1081, 0.0
          %v1104 = vmax.f32 %v1086, 0.0
          %v1105 = vpack.c.bf16 %v1090, %v1089
          %v1106 = vpack.c.bf16 %v1092, %v1091
          %v1107 = vpack.c.bf16 %v1094, %v1093
          %v1108 = vpack.c.bf16 %v1096, %v1095
          %v1109 = vpack.c.bf16 %v1098, %v1097
          %v1110 = vpack.c.bf16 %v1100, %v1099
          %v1111 = vpack.c.bf16 %v1102, %v1101
          %v1112 = vpack.c.bf16 %v1104, %v1103
          %v1113 = vld [vmem:[#allocation8] sm:$0xf]
          %v1114 = vld [vmem:[#allocation8 + $0x4] sm:$0xf]
          %v1115 = vld [vmem:[#allocation8 + $0x8] sm:$0xf]
          %v1116 = vld [vmem:[#allocation8 + $0xc] sm:$0xf]
          %v1117 = vld [vmem:[#allocation8 + $0x10] sm:$0xf]
          %v1118 = vld [vmem:[#allocation8 + $0x14] sm:$0xf]
          %v1119 = vld [vmem:[#allocation8 + $0x18] sm:$0xf]
          %v1120 = vld [vmem:[#allocation8 + $0x1c] sm:$0xf]
          %v1121 = vld [vmem:[#allocation8 + $0x20] sm:$0xf]
          %v1122 = vld [vmem:[#allocation8 + $0x24] sm:$0xf]
          %v1123 = vld [vmem:[#allocation8 + $0x28] sm:$0xf]
          %v1124 = vld [vmem:[#allocation8 + $0x2c] sm:$0xf]
          %v1125 = vld [vmem:[#allocation8 + $0x30] sm:$0xf]
          %v1126 = vld [vmem:[#allocation8 + $0x34] sm:$0xf]
          %v1127 = vld [vmem:[#allocation8 + $0x38] sm:$0xf]
          %v1128 = vld [vmem:[#allocation8 + $0x3c] sm:$0xf]
          %v1129 = vld [vmem:[#allocation8 + $0x40] sm:$0xf]
          %v1130 = vld [vmem:[#allocation8 + $0x44] sm:$0xf]
          %v1131 = vld [vmem:[#allocation8 + $0x48] sm:$0xf]
          %v1132 = vld [vmem:[#allocation8 + $0x4c] sm:$0xf]
          %v1133 = vld [vmem:[#allocation8 + $0x50] sm:$0xf]
          %v1134 = vld [vmem:[#allocation8 + $0x54] sm:$0xf]
          %v1135 = vld [vmem:[#allocation8 + $0x58] sm:$0xf]
          %v1136 = vld [vmem:[#allocation8 + $0x5c] sm:$0xf]
          %v1137 = vld [vmem:[#allocation8 + $0x60] sm:$0xf]
          %v1138 = vld [vmem:[#allocation8 + $0x64] sm:$0xf]
          %v1139 = vld [vmem:[#allocation8 + $0x68] sm:$0xf]
          %v1140 = vld [vmem:[#allocation8 + $0x6c] sm:$0xf]
          %v1141 = vld [vmem:[#allocation8 + $0x70] sm:$0xf]
          %v1142 = vld [vmem:[#allocation8 + $0x74] sm:$0xf]
          %v1143 = vld [vmem:[#allocation8 + $0x78] sm:$0xf]
          %v1144 = vld [vmem:[#allocation8 + $0x7c] sm:$0xf]
          %v1161 = vunpack.c.l.b16 %v1129
          %v1162 = vunpack.c.l.b16 %v1130
          %v1163 = vunpack.c.l.b16 %v1131
          %v1164 = vunpack.c.l.b16 %v1132
          %v1165 = vunpack.c.l.b16 %v1133
          %v1166 = vunpack.c.l.b16 %v1134
          %v1167 = vunpack.c.l.b16 %v1135
          %v1168 = vunpack.c.l.b16 %v1136
          %v1169 = vunpack.c.l.b16 %v1137
          %v1170 = vunpack.c.l.b16 %v1138
          %v1171 = vunpack.c.l.b16 %v1139
          %v1172 = vunpack.c.l.b16 %v1140
          %v1173 = vunpack.c.l.b16 %v1141
          %v1174 = vunpack.c.l.b16 %v1142
          %v1175 = vunpack.c.l.b16 %v1143
          %v1176 = vunpack.c.l.b16 %v1144
          %v1177 = vpack.c.b16 %v1162, %v1161
          %v1178 = vpack.c.b16 %v1164, %v1163
          %v1179 = vpack.c.b16 %v1166, %v1165
          %v1180 = vpack.c.b16 %v1168, %v1167
          %v1181 = vpack.c.b16 %v1170, %v1169
          %v1182 = vpack.c.b16 %v1172, %v1171
          %v1183 = vpack.c.b16 %v1174, %v1173
          %v1184 = vpack.c.b16 %v1176, %v1175
          %1193 = vmatprep.subr.bf16.mxu0 0
          %1194 = vmatpush1.bf16.msra.mxu0 %v1177
          %1195 = vmatprep.subr.bf16.mxu0 0
          %1196 = vmatpush1.bf16.msra.mxu0 %v1178
          %1197 = vmatprep.subr.bf16.mxu0 0
          %1198 = vmatpush1.bf16.msra.mxu0 %v1179
          %1199 = vmatprep.subr.bf16.mxu0 0
          %1200 = vmatpush1.bf16.msra.mxu0 %v1180
          %1201 = vmatprep.subr.bf16.mxu0 0
          %1202 = vmatpush1.bf16.msra.mxu0 %v1181
          %1203 = vmatprep.subr.bf16.mxu0 0
          %1204 = vmatpush1.bf16.msra.mxu0 %v1182
          %1205 = vmatprep.subr.bf16.mxu0 0
          %1206 = vmatpush1.bf16.msra.mxu0 %v1183
          %1207 = vmatprep.subr.bf16.mxu0 0
          %1208 = vmatpush1.bf16.msra.mxu0 %v1184
          %1209 = vmatprep.subr.bf16.mxu0 0
          %1210 = vmatpush1.bf16.msra.mxu0 0
          %1211 = vmatprep.subr.bf16.mxu0 0
          %1212 = vmatpush1.bf16.msra.mxu0 0
          %1213 = vmatprep.subr.bf16.mxu0 0
          %1214 = vmatpush1.bf16.msra.mxu0 0
          %1215 = vmatprep.subr.bf16.mxu0 0
          %1216 = vmatpush1.bf16.msra.mxu0 0
          %1217 = vmatprep.subr.bf16.mxu0 0
          %1218 = vmatpush1.bf16.msra.mxu0 0
          %1219 = vmatprep.subr.bf16.mxu0 0
          %1220 = vmatpush1.bf16.msra.mxu0 0
          %1221 = vmatprep.subr.bf16.mxu0 0
          %1222 = vmatpush1.bf16.msra.mxu0 0
          %1223 = vmatprep.subr.bf16.mxu0 0
          %1224 = vmatpush1.bf16.msra.mxu0 0
          %1225 = vmatprep.mubr.bf16.mxu0 0
          %1226 = vmatmul.mubr.bf16.gmra.mrb[0].mxu0 %v1105
          %v1227 = vpop.f32.mrb[0].mxu0
          %v1228 = vadd.f32 0.0, %v1227
          %v1229 = vpop.f32.mrb[0].mxu0
          %v1230 = vpop.f32.mrb[0].mxu0
          %v1231 = vadd.f32 0.0, %v1230
          %v1232 = vpop.f32.mrb[0].mxu0
          %1233 = vmatprep.mubr.bf16.mxu0 0
          %1234 = vmatmul.mubr.bf16.gmra.mrb[0].mxu0 %v1106
          %v1235 = vpop.f32.mrb[0].mxu0
          %v1236 = vadd.f32 0.0, %v1235
          %v1237 = vpop.f32.mrb[0].mxu0
          %v1238 = vpop.f32.mrb[0].mxu0
          %v1239 = vadd.f32 0.0, %v1238
          %v1240 = vpop.f32.mrb[0].mxu0
          %1241 = vmatprep.mubr.bf16.mxu0 0
          %1242 = vmatmul.mubr.bf16.gmra.mrb[0].mxu0 %v1107
          %v1243 = vpop.f32.mrb[0].mxu0
          %v1244 = vadd.f32 0.0, %v1243
          %v1245 = vpop.f32.mrb[0].mxu0
          %v1246 = vpop.f32.mrb[0].mxu0
          %v1247 = vadd.f32 0.0, %v1246
          %v1248 = vpop.f32.mrb[0].mxu0
          %1249 = vmatprep.mubr.bf16.mxu0 0
          %1250 = vmatmul.mubr.bf16.gmra.mrb[0].mxu0 %v1108
          %v1251 = vpop.f32.mrb[0].mxu0
          %v1252 = vadd.f32 0.0, %v1251
          %v1253 = vpop.f32.mrb[0].mxu0
          %v1254 = vpop.f32.mrb[0].mxu0
          %v1255 = vadd.f32 0.0, %v1254
          %v1256 = vpop.f32.mrb[0].mxu0
          %1257 = vmatprep.mubr.bf16.mxu0 0
          %1258 = vmatmul.mubr.bf16.gmra.mrb[0].mxu0 %v1109
          %v1259 = vpop.f32.mrb[0].mxu0
          %v1260 = vadd.f32 0.0, %v1259
          %v1261 = vpop.f32.mrb[0].mxu0
          %v1262 = vpop.f32.mrb[0].mxu0
          %v1263 = vadd.f32 0.0, %v1262
          %v1264 = vpop.f32.mrb[0].mxu0
          %1265 = vmatprep.mubr.bf16.mxu0 0
          %1266 = vmatmul.mubr.bf16.gmra.mrb[0].mxu0 %v1110
          %v1267 = vpop.f32.mrb[0].mxu0
          %v1268 = vadd.f32 0.0, %v1267
          %v1269 = vpop.f32.mrb[0].mxu0
          %v1270 = vpop.f32.mrb[0].mxu0
          %v1271 = vadd.f32 0.0, %v1270
          %v1272 = vpop.f32.mrb[0].mxu0
          %1273 = vmatprep.mubr.bf16.mxu0 0
          %1274 = vmatmul.mubr.bf16.gmra.mrb[0].mxu0 %v1111
          %v1275 = vpop.f32.mrb[0].mxu0
          %v1276 = vadd.f32 0.0, %v1275
          %v1277 = vpop.f32.mrb[0].mxu0
          %v1278 = vpop.f32.mrb[0].mxu0
          %v1279 = vadd.f32 0.0, %v1278
          %v1280 = vpop.f32.mrb[0].mxu0
          %1281 = vmatprep.mubr.bf16.mxu0 0
          %1282 = vmatmul.mubr.bf16.gmra.mrb[0].mxu0 %v1112
          %v1283 = vpop.f32.mrb[0].mxu0
          %v1284 = vadd.f32 0.0, %v1283
          %v1285 = vpop.f32.mrb[0].mxu0
          %v1286 = vpop.f32.mrb[0].mxu0
          %v1287 = vadd.f32 0.0, %v1286
          %v1288 = vpop.f32.mrb[0].mxu0
          %1289 = vdwg.mxu0
          %v1306 = vunpack.c.l.b16 %v1113
          %v1307 = vunpack.c.l.b16 %v1114
          %v1308 = vunpack.c.l.b16 %v1115
          %v1309 = vunpack.c.l.b16 %v1116
          %v1310 = vunpack.c.l.b16 %v1117
          %v1311 = vunpack.c.l.b16 %v1118
          %v1312 = vunpack.c.l.b16 %v1119
          %v1313 = vunpack.c.l.b16 %v1120
          %v1314 = vunpack.c.l.b16 %v1121
          %v1315 = vunpack.c.l.b16 %v1122
          %v1316 = vunpack.c.l.b16 %v1123
          %v1317 = vunpack.c.l.b16 %v1124
          %v1318 = vunpack.c.l.b16 %v1125
          %v1319 = vunpack.c.l.b16 %v1126
          %v1320 = vunpack.c.l.b16 %v1127
          %v1321 = vunpack.c.l.b16 %v1128
          %v1322 = vpack.c.b16 %v1307, %v1306
          %v1323 = vpack.c.b16 %v1309, %v1308
          %v1324 = vpack.c.b16 %v1311, %v1310
          %v1325 = vpack.c.b16 %v1313, %v1312
          %v1326 = vpack.c.b16 %v1315, %v1314
          %v1327 = vpack.c.b16 %v1317, %v1316
          %v1328 = vpack.c.b16 %v1319, %v1318
          %v1329 = vpack.c.b16 %v1321, %v1320
          %1338 = vmatprep.subr.bf16.mxu0 0
          %1339 = vmatpush1.bf16.msra.mxu0 %v1322
          %1340 = vmatprep.subr.bf16.mxu0 0
          %1341 = vmatpush1.bf16.msra.mxu0 %v1323
          %1342 = vmatprep.subr.bf16.mxu0 0
          %1343 = vmatpush1.bf16.msra.mxu0 %v1324
          %1344 = vmatprep.subr.bf16.mxu0 0
          %1345 = vmatpush1.bf16.msra.mxu0 %v1325
          %1346 = vmatprep.subr.bf16.mxu0 0
          %1347 = vmatpush1.bf16.msra.mxu0 %v1326
          %1348 = vmatprep.subr.bf16.mxu0 0
          %1349 = vmatpush1.bf16.msra.mxu0 %v1327
          %1350 = vmatprep.subr.bf16.mxu0 0
          %1351 = vmatpush1.bf16.msra.mxu0 %v1328
          %1352 = vmatprep.subr.bf16.mxu0 0
          %1353 = vmatpush1.bf16.msra.mxu0 %v1329
          %1354 = vmatprep.subr.bf16.mxu0 0
          %1355 = vmatpush1.bf16.msra.mxu0 0
          %1356 = vmatprep.subr.bf16.mxu0 0
          %1357 = vmatpush1.bf16.msra.mxu0 0
          %1358 = vmatprep.subr.bf16.mxu0 0
          %1359 = vmatpush1.bf16.msra.mxu0 0
          %1360 = vmatprep.subr.bf16.mxu0 0
          %1361 = vmatpush1.bf16.msra.mxu0 0
          %1362 = vmatprep.subr.bf16.mxu0 0
          %1363 = vmatpush1.bf16.msra.mxu0 0
          %1364 = vmatprep.subr.bf16.mxu0 0
          %1365 = vmatpush1.bf16.msra.mxu0 0
          %1366 = vmatprep.subr.bf16.mxu0 0
          %1367 = vmatpush1.bf16.msra.mxu0 0
          %1368 = vmatprep.subr.bf16.mxu0 0
          %1369 = vmatpush1.bf16.msra.mxu0 0
          %1370 = vmatprep.mubr.bf16.mxu0 0
          %1371 = vmatmul.mubr.bf16.gmra.mrb[0].mxu0 %v870
          %v1372 = vpop.f32.mrb[0].mxu0
          %v1373 = vadd.f32 %v1228, %v1372
          %v1374 = vpop.f32.mrb[0].mxu0
          %v1375 = vpop.f32.mrb[0].mxu0
          %v1376 = vadd.f32 %v1231, %v1375
          %v1377 = vpop.f32.mrb[0].mxu0
          %1378 = vmatprep.mubr.bf16.mxu0 0
          %1379 = vmatmul.mubr.bf16.gmra.mrb[0].mxu0 %v871
          %v1380 = vpop.f32.mrb[0].mxu0
          %v1381 = vadd.f32 %v1236, %v1380
          %v1382 = vpop.f32.mrb[0].mxu0
          %v1383 = vpop.f32.mrb[0].mxu0
          %v1384 = vadd.f32 %v1239, %v1383
          %v1385 = vpop.f32.mrb[0].mxu0
          %1386 = vmatprep.mubr.bf16.mxu0 0
          %1387 = vmatmul.mubr.bf16.gmra.mrb[0].mxu0 %v872
          %v1388 = vpop.f32.mrb[0].mxu0
          %v1389 = vadd.f32 %v1244, %v1388
          %v1390 = vpop.f32.mrb[0].mxu0
          %v1391 = vpop.f32.mrb[0].mxu0
          %v1392 = vadd.f32 %v1247, %v1391
          %v1393 = vpop.f32.mrb[0].mxu0
          %1394 = vmatprep.mubr.bf16.mxu0 0
          %1395 = vmatmul.mubr.bf16.gmra.mrb[0].mxu0 %v873
          %v1396 = vpop.f32.mrb[0].mxu0
          %v1397 = vadd.f32 %v1252, %v1396
          %v1398 = vpop.f32.mrb[0].mxu0
          %v1399 = vpop.f32.mrb[0].mxu0
          %v1400 = vadd.f32 %v1255, %v1399
          %v1401 = vpop.f32.mrb[0].mxu0
          %1402 = vmatprep.mubr.bf16.mxu0 0
          %1403 = vmatmul.mubr.bf16.gmra.mrb[0].mxu0 %v874
          %v1404 = vpop.f32.mrb[0].mxu0
          %v1405 = vadd.f32 %v1260, %v1404
          %v1406 = vpop.f32.mrb[0].mxu0
          %v1407 = vpop.f32.mrb[0].mxu0
          %v1408 = vadd.f32 %v1263, %v1407
          %v1409 = vpop.f32.mrb[0].mxu0
          %1410 = vmatprep.mubr.bf16.mxu0 0
          %1411 = vmatmul.mubr.bf16.gmra.mrb[0].mxu0 %v875
          %v1412 = vpop.f32.mrb[0].mxu0
          %v1413 = vadd.f32 %v1268, %v1412
          %v1414 = vpop.f32.mrb[0].mxu0
          %v1415 = vpop.f32.mrb[0].mxu0
          %v1416 = vadd.f32 %v1271, %v1415
          %v1417 = vpop.f32.mrb[0].mxu0
          %1418 = vmatprep.mubr.bf16.mxu0 0
          %1419 = vmatmul.mubr.bf16.gmra.mrb[0].mxu0 %v876
          %v1420 = vpop.f32.mrb[0].mxu0
          %v1421 = vadd.f32 %v1276, %v1420
          %v1422 = vpop.f32.mrb[0].mxu0
          %v1423 = vpop.f32.mrb[0].mxu0
          %v1424 = vadd.f32 %v1279, %v1423
          %v1425 = vpop.f32.mrb[0].mxu0
          %1426 = vmatprep.mubr.bf16.mxu0 0
          %1427 = vmatmul.mubr.bf16.gmra.mrb[0].mxu0 %v877
          %v1428 = vpop.f32.mrb[0].mxu0
          %v1429 = vadd.f32 %v1284, %v1428
          %v1430 = vpop.f32.mrb[0].mxu0
          %v1431 = vpop.f32.mrb[0].mxu0
          %v1432 = vadd.f32 %v1287, %v1431
          %v1433 = vpop.f32.mrb[0].mxu0
          %1434 = vdwg.mxu0
          %v1435 = vpack.c.bf16 %v1376, %v1373
          %v1436 = vpack.c.bf16 %v1384, %v1381
          %v1437 = vpack.c.bf16 %v1392, %v1389
          %v1438 = vpack.c.bf16 %v1400, %v1397
          %v1439 = vpack.c.bf16 %v1408, %v1405
          %v1440 = vpack.c.bf16 %v1416, %v1413
          %v1441 = vpack.c.bf16 %v1424, %v1421
          %v1442 = vpack.c.bf16 %v1432, %v1429
          %s1443 = sshra.s32 %s437, 4
          %s1444 = sand.u32 %s437, 15
          %s1445 = smul.addr %s1443, 8
          %s1446 = scalar_lea.vmem [#allocation2], %s1445
          %1447 = vst [vmem:[%s1446] sm:$0xff] %v1435
          %1448 = vst [vmem:[%s1446 + $0x8] sm:$0xff] %v1436
          %1449 = vst [vmem:[%s1446 + $0x10] sm:$0xff] %v1437
          %1450 = vst [vmem:[%s1446 + $0x18] sm:$0xff] %v1438
          %1451 = vst [vmem:[%s1446 + $0x20] sm:$0xff] %v1439
          %1452 = vst [vmem:[%s1446 + $0x28] sm:$0xff] %v1440
          %1453 = vst [vmem:[%s1446 + $0x30] sm:$0xff] %v1441
          %1454 = vst [vmem:[%s1446 + $0x38] sm:$0xff] %v1442
        $region76: #{tpu_custom_call.1} parent=59 // pred_fallthru
          _
        %p1455 = scmp.eq.s32.totalorder %s28, 1
        // Predicated region
        $region81: #{tpu_custom_call.1} parent=59 // pred_check
          %p1456 = pneg %p1455
        $region82: #{tpu_custom_call.1} parent=59 // pred_check_branch
          %1458 = sbr.rel (%p1456) target = $region84
        $region83: #{tpu_custom_call.1} parent=59 // pred_region
          %p1459 = scmp.eq.s32.totalorder %s29, 0
          // Predicated region
          $region85: #{tpu_custom_call.1} parent=83 // pred_check
            %p1460 = pneg %p1459
          $region86: #{tpu_custom_call.1} parent=83 // pred_check_branch
            %1462 = sbr.rel (%p1460) target = $region88
          $region87: #{tpu_custom_call.1} parent=83 // pred_region
            %1463 = vst [vmem:[#allocation11] sm:$0xff] 0.0
            %1464 = vst [vmem:[#allocation11 + $0x8] sm:$0xff] 0.0
          $region88: #{tpu_custom_call.1} parent=83 // pred_fallthru
            _
          %s1465 = sshra.s32 %s437, 3
          %s1466 = sand.u32 %s437, 7
          %s1467 = smul.u32 %s1465, 2
          %s1468 = smul.addr %s1467, 4
          %s1469 = scalar_lea.vmem %s0, %s1468
          %v1470 = vld [vmem:[%s1469] sm:$0xff]
          %v1471 = vld [vmem:[%s1469 + $0x8] sm:$0xff]
          %v1472 = vld [vmem:[%s1469 + $0x10] sm:$0xff]
          %v1473 = vld [vmem:[%s1469 + $0x18] sm:$0xff]
          %v1474 = vld [vmem:[%s1469 + $0x20] sm:$0xff]
          %v1475 = vld [vmem:[%s1469 + $0x28] sm:$0xff]
          %v1476 = vld [vmem:[%s1469 + $0x30] sm:$0xff]
          %v1477 = vld [vmem:[%s1469 + $0x38] sm:$0xff]
          %v1478 = vld [vmem:[%s1469 + $0x40] sm:$0xff]
          %v1479 = vld [vmem:[%s1469 + $0x48] sm:$0xff]
          %v1480 = vld [vmem:[%s1469 + $0x50] sm:$0xff]
          %v1481 = vld [vmem:[%s1469 + $0x58] sm:$0xff]
          %v1482 = vld [vmem:[%s1469 + $0x60] sm:$0xff]
          %v1483 = vld [vmem:[%s1469 + $0x68] sm:$0xff]
          %v1484 = vld [vmem:[%s1469 + $0x70] sm:$0xff]
          %v1485 = vld [vmem:[%s1469 + $0x78] sm:$0xff]
          %v1486 = vld [vmem:[#allocation2] sm:$0xff]
          %v1487 = vld [vmem:[#allocation2 + $0x8] sm:$0xff]
          %v1488 = vld [vmem:[#allocation2 + $0x10] sm:$0xff]
          %v1489 = vld [vmem:[#allocation2 + $0x18] sm:$0xff]
          %v1490 = vld [vmem:[#allocation2 + $0x20] sm:$0xff]
          %v1491 = vld [vmem:[#allocation2 + $0x28] sm:$0xff]
          %v1492 = vld [vmem:[#allocation2 + $0x30] sm:$0xff]
          %v1493 = vld [vmem:[#allocation2 + $0x38] sm:$0xff]
          %v1494 = vld [vmem:[#allocation2 + $0x40] sm:$0xff]
          %v1495 = vld [vmem:[#allocation2 + $0x48] sm:$0xff]
          %v1496 = vld [vmem:[#allocation2 + $0x50] sm:$0xff]
          %v1497 = vld [vmem:[#allocation2 + $0x58] sm:$0xff]
          %v1498 = vld [vmem:[#allocation2 + $0x60] sm:$0xff]
          %v1499 = vld [vmem:[#allocation2 + $0x68] sm:$0xff]
          %v1500 = vld [vmem:[#allocation2 + $0x70] sm:$0xff]
          %v1501 = vld [vmem:[#allocation2 + $0x78] sm:$0xff]
          %v1502 = vld [vmem:[%s4] sm:$0x1]
          %v1504 = vlaneseq
          %v1505 = vshrl.u32 %v1504, 7
          %v1506 = vsub.s32 0, %v1505
          %v1507 = vrot.slane %v1502, %v1506
          %v1525 = vunpack.c.l.b16 %v1470
          %v1526 = vunpack.c.h.b16 %v1470
          %v1527 = vunpack.c.l.b16 %v1471
          %v1528 = vunpack.c.h.b16 %v1471
          %v1529 = vunpack.c.l.b16 %v1472
          %v1530 = vunpack.c.h.b16 %v1472
          %v1531 = vunpack.c.l.b16 %v1473
          %v1532 = vunpack.c.h.b16 %v1473
          %v1533 = vunpack.c.l.b16 %v1474
          %v1534 = vunpack.c.h.b16 %v1474
          %v1535 = vunpack.c.l.b16 %v1475
          %v1536 = vunpack.c.h.b16 %v1475
          %v1537 = vunpack.c.l.b16 %v1476
          %v1538 = vunpack.c.h.b16 %v1476
          %v1539 = vunpack.c.l.b16 %v1477
          %v1540 = vunpack.c.h.b16 %v1477
          %v1541 = vunpack.c.l.b16 %v1478
          %v1542 = vunpack.c.h.b16 %v1478
          %v1543 = vunpack.c.l.b16 %v1479
          %v1544 = vunpack.c.h.b16 %v1479
          %v1545 = vunpack.c.l.b16 %v1480
          %v1546 = vunpack.c.h.b16 %v1480
          %v1547 = vunpack.c.l.b16 %v1481
          %v1548 = vunpack.c.h.b16 %v1481
          %v1549 = vunpack.c.l.b16 %v1482
          %v1550 = vunpack.c.h.b16 %v1482
          %v1551 = vunpack.c.l.b16 %v1483
          %v1552 = vunpack.c.h.b16 %v1483
          %v1553 = vunpack.c.l.b16 %v1484
          %v1554 = vunpack.c.h.b16 %v1484
          %v1555 = vunpack.c.l.b16 %v1485
          %v1556 = vunpack.c.h.b16 %v1485
          %v1557 = vpack.c.b16 %v1527, %v1525
          %v1558 = vpack.c.b16 %v1528, %v1526
          %v1559 = vpack.c.b16 %v1531, %v1529
          %v1560 = vpack.c.b16 %v1532, %v1530
          %v1561 = vpack.c.b16 %v1535, %v1533
          %v1562 = vpack.c.b16 %v1536, %v1534
          %v1563 = vpack.c.b16 %v1539, %v1537
          %v1564 = vpack.c.b16 %v1540, %v1538
          %v1565 = vpack.c.b16 %v1543, %v1541
          %v1566 = vpack.c.b16 %v1544, %v1542
          %v1567 = vpack.c.b16 %v1547, %v1545
          %v1568 = vpack.c.b16 %v1548, %v1546
          %v1569 = vpack.c.b16 %v1551, %v1549
          %v1570 = vpack.c.b16 %v1552, %v1550
          %v1571 = vpack.c.b16 %v1555, %v1553
          %v1572 = vpack.c.b16 %v1556, %v1554
          %1589 = vmatprep.subr.bf16.mxu0 0
          %1590 = vmatpush1.bf16.msra.mxu0 %v1486
          %1591 = vmatprep.subr.bf16.mxu0 0
          %1592 = vmatpush1.bf16.msra.mxu0 %v1487
          %1593 = vmatprep.subr.bf16.mxu0 0
          %1594 = vmatpush1.bf16.msra.mxu0 %v1488
          %1595 = vmatprep.subr.bf16.mxu0 0
          %1596 = vmatpush1.bf16.msra.mxu0 %v1489
          %1597 = vmatprep.subr.bf16.mxu0 0
          %1598 = vmatpush1.bf16.msra.mxu0 %v1490
          %1599 = vmatprep.subr.bf16.mxu0 0
          %1600 = vmatpush1.bf16.msra.mxu0 %v1491
          %1601 = vmatprep.subr.bf16.mxu0 0
          %1602 = vmatpush1.bf16.msra.mxu0 %v1492
          %1603 = vmatprep.subr.bf16.mxu0 0
          %1604 = vmatpush1.bf16.msra.mxu0 %v1493
          %1605 = vmatprep.subr.bf16.mxu0 0
          %1606 = vmatpush1.bf16.msra.mxu0 %v1494
          %1607 = vmatprep.subr.bf16.mxu0 0
          %1608 = vmatpush1.bf16.msra.mxu0 %v1495
          %1609 = vmatprep.subr.bf16.mxu0 0
          %1610 = vmatpush1.bf16.msra.mxu0 %v1496
          %1611 = vmatprep.subr.bf16.mxu0 0
          %1612 = vmatpush1.bf16.msra.mxu0 %v1497
          %1613 = vmatprep.subr.bf16.mxu0 0
          %1614 = vmatpush1.bf16.msra.mxu0 %v1498
          %1615 = vmatprep.subr.bf16.mxu0 0
          %1616 = vmatpush1.bf16.msra.mxu0 %v1499
          %1617 = vmatprep.subr.bf16.mxu0 0
          %1618 = vmatpush1.bf16.msra.mxu0 %v1500
          %1619 = vmatprep.subr.bf16.mxu0 0
          %1620 = vmatpush1.bf16.msra.mxu0 %v1501
          %1621 = vmatprep.mubr.bf16.mxu0 %v1558
          %1622 = vmatmul.mubr.bf16.gmra.mrb[0].mxu0 %v1557
          %v1623 = vpop.f32.mrb[0].mxu0
          %v1624 = vadd.f32 %v1507, %v1623
          %v1625 = vpop.f32.mrb[0].mxu0
          %v1626 = vpop.f32.mrb[0].mxu0
          %v1627 = vadd.f32 %v1507, %v1626
          %v1628 = vpop.f32.mrb[0].mxu0
          %1629 = vmatprep.mubr.bf16.mxu0 %v1560
          %1630 = vmatmul.mubr.bf16.gmra.mrb[0].mxu0 %v1559
          %v1631 = vpop.f32.mrb[0].mxu0
          %v1632 = vadd.f32 %v1507, %v1631
          %v1633 = vpop.f32.mrb[0].mxu0
          %v1634 = vpop.f32.mrb[0].mxu0
          %v1635 = vadd.f32 %v1507, %v1634
          %v1636 = vpop.f32.mrb[0].mxu0
          %1637 = vmatprep.mubr.bf16.mxu0 %v1562
          %1638 = vmatmul.mubr.bf16.gmra.mrb[0].mxu0 %v1561
          %v1639 = vpop.f32.mrb[0].mxu0
          %v1640 = vadd.f32 %v1507, %v1639
          %v1641 = vpop.f32.mrb[0].mxu0
          %v1642 = vpop.f32.mrb[0].mxu0
          %v1643 = vadd.f32 %v1507, %v1642
          %v1644 = vpop.f32.mrb[0].mxu0
          %1645 = vmatprep.mubr.bf16.mxu0 %v1564
          %1646 = vmatmul.mubr.bf16.gmra.mrb[0].mxu0 %v1563
          %v1647 = vpop.f32.mrb[0].mxu0
          %v1648 = vadd.f32 %v1507, %v1647
          %v1649 = vpop.f32.mrb[0].mxu0
          %v1650 = vpop.f32.mrb[0].mxu0
          %v1651 = vadd.f32 %v1507, %v1650
          %v1652 = vpop.f32.mrb[0].mxu0
          %1653 = vmatprep.mubr.bf16.mxu0 %v1566
          %1654 = vmatmul.mubr.bf16.gmra.mrb[0].mxu0 %v1565
          %v1655 = vpop.f32.mrb[0].mxu0
          %v1656 = vadd.f32 %v1507, %v1655
          %v1657 = vpop.f32.mrb[0].mxu0
          %v1658 = vpop.f32.mrb[0].mxu0
          %v1659 = vadd.f32 %v1507, %v1658
          %v1660 = vpop.f32.mrb[0].mxu0
          %1661 = vmatprep.mubr.bf16.mxu0 %v1568
          %1662 = vmatmul.mubr.bf16.gmra.mrb[0].mxu0 %v1567
          %v1663 = vpop.f32.mrb[0].mxu0
          %v1664 = vadd.f32 %v1507, %v1663
          %v1665 = vpop.f32.mrb[0].mxu0
          %v1666 = vpop.f32.mrb[0].mxu0
          %v1667 = vadd.f32 %v1507, %v1666
          %v1668 = vpop.f32.mrb[0].mxu0
          %1669 = vmatprep.mubr.bf16.mxu0 %v1570
          %1670 = vmatmul.mubr.bf16.gmra.mrb[0].mxu0 %v1569
          %v1671 = vpop.f32.mrb[0].mxu0
          %v1672 = vadd.f32 %v1507, %v1671
          %v1673 = vpop.f32.mrb[0].mxu0
          %v1674 = vpop.f32.mrb[0].mxu0
          %v1675 = vadd.f32 %v1507, %v1674
          %v1676 = vpop.f32.mrb[0].mxu0
          %1677 = vmatprep.mubr.bf16.mxu0 %v1572
          %1678 = vmatmul.mubr.bf16.gmra.mrb[0].mxu0 %v1571
          %v1679 = vpop.f32.mrb[0].mxu0
          %v1680 = vadd.f32 %v1507, %v1679
          %v1681 = vpop.f32.mrb[0].mxu0
          %v1682 = vpop.f32.mrb[0].mxu0
          %v1683 = vadd.f32 %v1507, %v1682
          %v1684 = vpop.f32.mrb[0].mxu0
          %1685 = vdwg.mxu0
          %v1686 = vmax.f32 %v1624, 0.0
          %v1687 = vmax.f32 %v1627, 0.0
          %v1688 = vmax.f32 %v1632, 0.0
          %v1689 = vmax.f32 %v1635, 0.0
          %v1690 = vmax.f32 %v1640, 0.0
          %v1691 = vmax.f32 %v1643, 0.0
          %v1692 = vmax.f32 %v1648, 0.0
          %v1693 = vmax.f32 %v1651, 0.0
          %v1694 = vmax.f32 %v1656, 0.0
          %v1695 = vmax.f32 %v1659, 0.0
          %v1696 = vmax.f32 %v1664, 0.0
          %v1697 = vmax.f32 %v1667, 0.0
          %v1698 = vmax.f32 %v1672, 0.0
          %v1699 = vmax.f32 %v1675, 0.0
          %v1700 = vmax.f32 %v1680, 0.0
          %v1701 = vmax.f32 %v1683, 0.0
          %v1702 = vld [vmem:[%s430] sm:$0xff]
          %v1703 = vld [vmem:[%s430 + $0x8] sm:$0xff]
          %v1704 = vld [vmem:[%s430 + $0x10] sm:$0xff]
          %v1705 = vld [vmem:[%s430 + $0x18] sm:$0xff]
          %v1706 = vld [vmem:[%s430 + $0x20] sm:$0xff]
          %v1707 = vld [vmem:[%s430 + $0x28] sm:$0xff]
          %v1708 = vld [vmem:[%s430 + $0x30] sm:$0xff]
          %v1709 = vld [vmem:[%s430 + $0x38] sm:$0xff]
          %v1710 = vld [vmem:[%s430 + $0x40] sm:$0xff]
          %v1711 = vld [vmem:[%s430 + $0x48] sm:$0xff]
          %v1712 = vld [vmem:[%s430 + $0x50] sm:$0xff]
          %v1713 = vld [vmem:[%s430 + $0x58] sm:$0xff]
          %v1714 = vld [vmem:[%s430 + $0x60] sm:$0xff]
          %v1715 = vld [vmem:[%s430 + $0x68] sm:$0xff]
          %v1716 = vld [vmem:[%s430 + $0x70] sm:$0xff]
          %v1717 = vld [vmem:[%s430 + $0x78] sm:$0xff]
          %v1718 = vld [vmem:[#allocation3] sm:$0xff]
          %vm1719 = vcmask 64512
          %v1721 = vsel %vm1719, %v1702, 0
          %v1724 = vsel %vm1719, %v1703, 0
          %v1727 = vsel %vm1719, %v1704, 0
          %v1730 = vsel %vm1719, %v1705, 0
          %v1733 = vsel %vm1719, %v1706, 0
          %v1736 = vsel %vm1719, %v1707, 0
          %v1739 = vsel %vm1719, %v1708, 0
          %v1742 = vsel %vm1719, %v1709, 0
          %v1745 = vsel %vm1719, %v1710, 0
          %v1748 = vsel %vm1719, %v1711, 0
          %v1751 = vsel %vm1719, %v1712, 0
          %v1754 = vsel %vm1719, %v1713, 0
          %v1757 = vsel %vm1719, %v1714, 0
          %v1760 = vsel %vm1719, %v1715, 0
          %v1763 = vsel %vm1719, %v1716, 0
          %v1766 = vsel %vm1719, %v1717, 0
          %1768 = vmatprep.subr.mxu0 0.0
          %1769 = vmatpush1.msra.mxu0 %v1718
          %1770 = vmatprep.subr.mxu0 0.0
          %1771 = vmatpush1.msra.mxu0 0.0
          %1772 = vmatprep.subr.mxu0 0.0
          %1773 = vmatpush1.msra.mxu0 0.0
          %1774 = vmatprep.subr.mxu0 0.0
          %1775 = vmatpush1.msra.mxu0 0.0
          %1776 = vmatprep.subr.mxu0 0.0
          %1777 = vmatpush1.msra.mxu0 0.0
          %1778 = vmatprep.subr.mxu0 0.0
          %1779 = vmatpush1.msra.mxu0 0.0
          %1780 = vmatprep.subr.mxu0 0.0
          %1781 = vmatpush1.msra.mxu0 0.0
          %1782 = vmatprep.subr.mxu0 0.0
          %1783 = vmatpush1.msra.mxu0 0.0
          %1784 = vmatprep.subr.mxu0 0.0
          %1785 = vmatpush1.msra.mxu0 0.0
          %1786 = vmatprep.subr.mxu0 0.0
          %1787 = vmatpush1.msra.mxu0 0.0
          %1788 = vmatprep.subr.mxu0 0.0
          %1789 = vmatpush1.msra.mxu0 0.0
          %1790 = vmatprep.subr.mxu0 0.0
          %1791 = vmatpush1.msra.mxu0 0.0
          %1792 = vmatprep.subr.mxu0 0.0
          %1793 = vmatpush1.msra.mxu0 0.0
          %1794 = vmatprep.subr.mxu0 0.0
          %1795 = vmatpush1.msra.mxu0 0.0
          %1796 = vmatprep.subr.mxu0 0.0
          %1797 = vmatpush1.msra.mxu0 0.0
          %1798 = vmatprep.subr.mxu0 0.0
          %1799 = vmatpush1.msra.mxu0 0.0
          %1800 = vmatprep.subr.mxu0 0.0
          %1801 = vmatpush1.msra.mxu0 0.0
          %1802 = vmatprep.subr.mxu0 0.0
          %1803 = vmatpush1.msra.mxu0 0.0
          %1804 = vmatprep.subr.mxu0 0.0
          %1805 = vmatpush1.msra.mxu0 0.0
          %1806 = vmatprep.subr.mxu0 0.0
          %1807 = vmatpush1.msra.mxu0 0.0
          %1808 = vmatprep.subr.mxu0 0.0
          %1809 = vmatpush1.msra.mxu0 0.0
          %1810 = vmatprep.subr.mxu0 0.0
          %1811 = vmatpush1.msra.mxu0 0.0
          %1812 = vmatprep.subr.mxu0 0.0
          %1813 = vmatpush1.msra.mxu0 0.0
          %1814 = vmatprep.subr.mxu0 0.0
          %1815 = vmatpush1.msra.mxu0 0.0
          %1816 = vmatprep.subr.mxu0 0.0
          %1817 = vmatpush1.msra.mxu0 0.0
          %1818 = vmatprep.subr.mxu0 0.0
          %1819 = vmatpush1.msra.mxu0 0.0
          %1820 = vmatprep.subr.mxu0 0.0
          %1821 = vmatpush1.msra.mxu0 0.0
          %1822 = vmatprep.subr.mxu0 0.0
          %1823 = vmatpush1.msra.mxu0 0.0
          %1824 = vmatprep.subr.mxu0 0.0
          %1825 = vmatpush1.msra.mxu0 0.0
          %1826 = vmatprep.subr.mxu0 0.0
          %1827 = vmatpush1.msra.mxu0 0.0
          %1828 = vmatprep.subr.mxu0 0.0
          %1829 = vmatpush1.msra.mxu0 0.0
          %1830 = vmatprep.subr.mxu0 0.0
          %1831 = vmatpush1.msra.mxu0 0.0
          %1832 = vmatprep.mubr.f32.mxu0 0.0
          %1833 = vmatmul.mubr.f32.gmra.mrb[0].mxu0 %v1721
          %v1834 = vpop.f32.mrb[0].mxu0
          %v1835 = vadd.f32 0.0, %v1834
          %v1836 = vpop.f32.mrb[0].mxu0
          %1837 = vmatprep.mubr.f32.mxu0 0.0
          %1838 = vmatmul.mubr.f32.gmra.mrb[0].mxu0 %v1724
          %v1839 = vpop.f32.mrb[0].mxu0
          %v1840 = vadd.f32 0.0, %v1839
          %v1841 = vpop.f32.mrb[0].mxu0
          %1842 = vmatprep.mubr.f32.mxu0 0.0
          %1843 = vmatmul.mubr.f32.gmra.mrb[0].mxu0 %v1727
          %v1844 = vpop.f32.mrb[0].mxu0
          %v1845 = vadd.f32 0.0, %v1844
          %v1846 = vpop.f32.mrb[0].mxu0
          %1847 = vmatprep.mubr.f32.mxu0 0.0
          %1848 = vmatmul.mubr.f32.gmra.mrb[0].mxu0 %v1730
          %v1849 = vpop.f32.mrb[0].mxu0
          %v1850 = vadd.f32 0.0, %v1849
          %v1851 = vpop.f32.mrb[0].mxu0
          %1852 = vmatprep.mubr.f32.mxu0 0.0
          %1853 = vmatmul.mubr.f32.gmra.mrb[0].mxu0 %v1733
          %v1854 = vpop.f32.mrb[0].mxu0
          %v1855 = vadd.f32 0.0, %v1854
          %v1856 = vpop.f32.mrb[0].mxu0
          %1857 = vmatprep.mubr.f32.mxu0 0.0
          %1858 = vmatmul.mubr.f32.gmra.mrb[0].mxu0 %v1736
          %v1859 = vpop.f32.mrb[0].mxu0
          %v1860 = vadd.f32 0.0, %v1859
          %v1861 = vpop.f32.mrb[0].mxu0
          %1862 = vmatprep.mubr.f32.mxu0 0.0
          %1863 = vmatmul.mubr.f32.gmra.mrb[0].mxu0 %v1739
          %v1864 = vpop.f32.mrb[0].mxu0
          %v1865 = vadd.f32 0.0, %v1864
          %v1866 = vpop.f32.mrb[0].mxu0
          %1867 = vmatprep.mubr.f32.mxu0 0.0
          %1868 = vmatmul.mubr.f32.gmra.mrb[0].mxu0 %v1742
          %v1869 = vpop.f32.mrb[0].mxu0
          %v1870 = vadd.f32 0.0, %v1869
          %v1871 = vpop.f32.mrb[0].mxu0
          %1872 = vmatprep.mubr.f32.mxu0 0.0
          %1873 = vmatmul.mubr.f32.gmra.mrb[0].mxu0 %v1745
          %v1874 = vpop.f32.mrb[0].mxu0
          %v1875 = vadd.f32 0.0, %v1874
          %v1876 = vpop.f32.mrb[0].mxu0
          %1877 = vmatprep.mubr.f32.mxu0 0.0
          %1878 = vmatmul.mubr.f32.gmra.mrb[0].mxu0 %v1748
          %v1879 = vpop.f32.mrb[0].mxu0
          %v1880 = vadd.f32 0.0, %v1879
          %v1881 = vpop.f32.mrb[0].mxu0
          %1882 = vmatprep.mubr.f32.mxu0 0.0
          %1883 = vmatmul.mubr.f32.gmra.mrb[0].mxu0 %v1751
          %v1884 = vpop.f32.mrb[0].mxu0
          %v1885 = vadd.f32 0.0, %v1884
          %v1886 = vpop.f32.mrb[0].mxu0
          %1887 = vmatprep.mubr.f32.mxu0 0.0
          %1888 = vmatmul.mubr.f32.gmra.mrb[0].mxu0 %v1754
          %v1889 = vpop.f32.mrb[0].mxu0
          %v1890 = vadd.f32 0.0, %v1889
          %v1891 = vpop.f32.mrb[0].mxu0
          %1892 = vmatprep.mubr.f32.mxu0 0.0
          %1893 = vmatmul.mubr.f32.gmra.mrb[0].mxu0 %v1757
          %v1894 = vpop.f32.mrb[0].mxu0
          %v1895 = vadd.f32 0.0, %v1894
          %v1896 = vpop.f32.mrb[0].mxu0
          %1897 = vmatprep.mubr.f32.mxu0 0.0
          %1898 = vmatmul.mubr.f32.gmra.mrb[0].mxu0 %v1760
          %v1899 = vpop.f32.mrb[0].mxu0
          %v1900 = vadd.f32 0.0, %v1899
          %v1901 = vpop.f32.mrb[0].mxu0
          %1902 = vmatprep.mubr.f32.mxu0 0.0
          %1903 = vmatmul.mubr.f32.gmra.mrb[0].mxu0 %v1763
          %v1904 = vpop.f32.mrb[0].mxu0
          %v1905 = vadd.f32 0.0, %v1904
          %v1906 = vpop.f32.mrb[0].mxu0
          %1907 = vmatprep.mubr.f32.mxu0 0.0
          %1908 = vmatmul.mubr.f32.gmra.mrb[0].mxu0 %v1766
          %v1909 = vpop.f32.mrb[0].mxu0
          %v1910 = vadd.f32 0.0, %v1909
          %v1911 = vpop.f32.mrb[0].mxu0
          %1912 = vdwg.mxu0
          %1913 = vst [vmem:[#allocation4] sm:$0xff] %v1686
          %1914 = vst [vmem:[#allocation4 + $0x10] sm:$0xff] %v1687
          %1915 = vst [vmem:[#allocation4 + $0x20] sm:$0xff] %v1688
          %1916 = vst [vmem:[#allocation4 + $0x30] sm:$0xff] %v1689
          %1917 = vst [vmem:[#allocation4 + $0x40] sm:$0xff] %v1690
          %1918 = vst [vmem:[#allocation4 + $0x50] sm:$0xff] %v1691
          %1919 = vst [vmem:[#allocation4 + $0x60] sm:$0xff] %v1692
          %1920 = vst [vmem:[#allocation4 + $0x70] sm:$0xff] %v1693
          %1921 = vst [vmem:[#allocation4 + $0x80] sm:$0xff] %v1694
          %1922 = vst [vmem:[#allocation4 + $0x90] sm:$0xff] %v1695
          %1923 = vst [vmem:[#allocation4 + $0xa0] sm:$0xff] %v1696
          %1924 = vst [vmem:[#allocation4 + $0xb0] sm:$0xff] %v1697
          %1925 = vst [vmem:[#allocation4 + $0xc0] sm:$0xff] %v1698
          %1926 = vst [vmem:[#allocation4 + $0xd0] sm:$0xff] %v1699
          %1927 = vst [vmem:[#allocation4 + $0xe0] sm:$0xff] %v1700
          %1928 = vst [vmem:[#allocation4 + $0xf0] sm:$0xff] %v1701
          %1929 = vst [vmem:[#allocation4 + $0x8] sm:$0xff] %v1835
          %1930 = vst [vmem:[#allocation4 + $0x18] sm:$0xff] %v1840
          %1931 = vst [vmem:[#allocation4 + $0x28] sm:$0xff] %v1845
          %1932 = vst [vmem:[#allocation4 + $0x38] sm:$0xff] %v1850
          %1933 = vst [vmem:[#allocation4 + $0x48] sm:$0xff] %v1855
          %1934 = vst [vmem:[#allocation4 + $0x58] sm:$0xff] %v1860
          %1935 = vst [vmem:[#allocation4 + $0x68] sm:$0xff] %v1865
          %1936 = vst [vmem:[#allocation4 + $0x78] sm:$0xff] %v1870
          %1937 = vst [vmem:[#allocation4 + $0x88] sm:$0xff] %v1875
          %1938 = vst [vmem:[#allocation4 + $0x98] sm:$0xff] %v1880
          %1939 = vst [vmem:[#allocation4 + $0xa8] sm:$0xff] %v1885
          %1940 = vst [vmem:[#allocation4 + $0xb8] sm:$0xff] %v1890
          %1941 = vst [vmem:[#allocation4 + $0xc8] sm:$0xff] %v1895
          %1942 = vst [vmem:[#allocation4 + $0xd8] sm:$0xff] %v1900
          %1943 = vst [vmem:[#allocation4 + $0xe8] sm:$0xff] %v1905
          %1944 = vst [vmem:[#allocation4 + $0xf8] sm:$0xff] %v1910
          %v1945 = vld [vmem:[#allocation11] sm:$0xff]
          %v1946 = vld [vmem:[#allocation11 + $0x8] sm:$0xff]
          %v1947 = vld [vmem:[%s435] sm:$0xff]
          %v1948 = vld [vmem:[#allocation4] sm:$0xff]
          %v1949 = vld [vmem:[#allocation4 + $0x8] sm:$0xff]
          %v1950 = vld [vmem:[#allocation4 + $0x10] sm:$0xff]
          %v1951 = vld [vmem:[#allocation4 + $0x18] sm:$0xff]
          %v1952 = vld [vmem:[#allocation4 + $0x20] sm:$0xff]
          %v1953 = vld [vmem:[#allocation4 + $0x28] sm:$0xff]
          %v1954 = vld [vmem:[#allocation4 + $0x30] sm:$0xff]
          %v1955 = vld [vmem:[#allocation4 + $0x38] sm:$0xff]
          %v1956 = vld [vmem:[#allocation4 + $0x40] sm:$0xff]
          %v1957 = vld [vmem:[#allocation4 + $0x48] sm:$0xff]
          %v1958 = vld [vmem:[#allocation4 + $0x50] sm:$0xff]
          %v1959 = vld [vmem:[#allocation4 + $0x58] sm:$0xff]
          %v1960 = vld [vmem:[#allocation4 + $0x60] sm:$0xff]
          %v1961 = vld [vmem:[#allocation4 + $0x68] sm:$0xff]
          %v1962 = vld [vmem:[#allocation4 + $0x70] sm:$0xff]
          %v1963 = vld [vmem:[#allocation4 + $0x78] sm:$0xff]
          %v1964 = vld [vmem:[#allocation4 + $0x80] sm:$0xff]
          %v1965 = vld [vmem:[#allocation4 + $0x88] sm:$0xff]
          %v1966 = vld [vmem:[#allocation4 + $0x90] sm:$0xff]
          %v1967 = vld [vmem:[#allocation4 + $0x98] sm:$0xff]
          %v1968 = vld [vmem:[#allocation4 + $0xa0] sm:$0xff]
          %v1969 = vld [vmem:[#allocation4 + $0xa8] sm:$0xff]
          %v1970 = vld [vmem:[#allocation4 + $0xb0] sm:$0xff]
          %v1971 = vld [vmem:[#allocation4 + $0xb8] sm:$0xff]
          %v1972 = vld [vmem:[#allocation4 + $0xc0] sm:$0xff]
          %v1973 = vld [vmem:[#allocation4 + $0xc8] sm:$0xff]
          %v1974 = vld [vmem:[#allocation4 + $0xd0] sm:$0xff]
          %v1975 = vld [vmem:[#allocation4 + $0xd8] sm:$0xff]
          %v1976 = vld [vmem:[#allocation4 + $0xe0] sm:$0xff]
          %v1977 = vld [vmem:[#allocation4 + $0xe8] sm:$0xff]
          %v1978 = vld [vmem:[#allocation4 + $0xf0] sm:$0xff]
          %v1979 = vld [vmem:[#allocation4 + $0xf8] sm:$0xff]
          %1980 = vmatprep.subr.mxu0 %v1949
          %1981 = vmatpush1.msra.mxu0 %v1948
          %1982 = vmatprep.subr.mxu0 %v1951
          %1983 = vmatpush1.msra.mxu0 %v1950
          %1984 = vmatprep.subr.mxu0 %v1953
          %1985 = vmatpush1.msra.mxu0 %v1952
          %1986 = vmatprep.subr.mxu0 %v1955
          %1987 = vmatpush1.msra.mxu0 %v1954
          %1988 = vmatprep.subr.mxu0 %v1957
          %1989 = vmatpush1.msra.mxu0 %v1956
          %1990 = vmatprep.subr.mxu0 %v1959
          %1991 = vmatpush1.msra.mxu0 %v1958
          %1992 = vmatprep.subr.mxu0 %v1961
          %1993 = vmatpush1.msra.mxu0 %v1960
          %1994 = vmatprep.subr.mxu0 %v1963
          %1995 = vmatpush1.msra.mxu0 %v1962
          %1996 = vmatprep.subr.mxu0 %v1965
          %1997 = vmatpush1.msra.mxu0 %v1964
          %1998 = vmatprep.subr.mxu0 %v1967
          %1999 = vmatpush1.msra.mxu0 %v1966
          %2000 = vmatprep.subr.mxu0 %v1969
          %2001 = vmatpush1.msra.mxu0 %v1968
          %2002 = vmatprep.subr.mxu0 %v1971
          %2003 = vmatpush1.msra.mxu0 %v1970
          %2004 = vmatprep.subr.mxu0 %v1973
          %2005 = vmatpush1.msra.mxu0 %v1972
          %2006 = vmatprep.subr.mxu0 %v1975
          %2007 = vmatpush1.msra.mxu0 %v1974
          %2008 = vmatprep.subr.mxu0 %v1977
          %2009 = vmatpush1.msra.mxu0 %v1976
          %2010 = vmatprep.subr.mxu0 %v1979
          %2011 = vmatpush1.msra.mxu0 %v1978
          %2012 = vmatprep.subr.mxu0 0.0
          %2013 = vmatpush1.msra.mxu0 0.0
          %2014 = vmatprep.subr.mxu0 0.0
          %2015 = vmatpush1.msra.mxu0 0.0
          %2016 = vmatprep.subr.mxu0 0.0
          %2017 = vmatpush1.msra.mxu0 0.0
          %2018 = vmatprep.subr.mxu0 0.0
          %2019 = vmatpush1.msra.mxu0 0.0
          %2020 = vmatprep.subr.mxu0 0.0
          %2021 = vmatpush1.msra.mxu0 0.0
          %2022 = vmatprep.subr.mxu0 0.0
          %2023 = vmatpush1.msra.mxu0 0.0
          %2024 = vmatprep.subr.mxu0 0.0
          %2025 = vmatpush1.msra.mxu0 0.0
          %2026 = vmatprep.subr.mxu0 0.0
          %2027 = vmatpush1.msra.mxu0 0.0
          %2028 = vmatprep.subr.mxu0 0.0
          %2029 = vmatpush1.msra.mxu0 0.0
          %2030 = vmatprep.subr.mxu0 0.0
          %2031 = vmatpush1.msra.mxu0 0.0
          %2032 = vmatprep.subr.mxu0 0.0
          %2033 = vmatpush1.msra.mxu0 0.0
          %2034 = vmatprep.subr.mxu0 0.0
          %2035 = vmatpush1.msra.mxu0 0.0
          %2036 = vmatprep.subr.mxu0 0.0
          %2037 = vmatpush1.msra.mxu0 0.0
          %2038 = vmatprep.subr.mxu0 0.0
          %2039 = vmatpush1.msra.mxu0 0.0
          %2040 = vmatprep.subr.mxu0 0.0
          %2041 = vmatpush1.msra.mxu0 0.0
          %2042 = vmatprep.subr.mxu0 0.0
          %2043 = vmatpush1.msra.mxu0 0.0
          %2044 = vmatprep.mubr.f32.mxu0 0.0
          %2045 = vmatmul.mubr.f32.gmra.mrb[0].mxu0 %v1947
          %v2046 = vpop.f32.mrb[0].mxu0
          %v2047 = vadd.f32 0.0, %v2046
          %v2048 = vpop.f32.mrb[0].mxu0
          %v2049 = vadd.f32 0.0, %v2048
          %2050 = vdwg.mxu0
          %v2051 = vadd.f32 %v1945, %v2047
          %v2052 = vadd.f32 %v1946, %v2049
          %2053 = vst [vmem:[#allocation11] sm:$0xff] %v2051
          %2054 = vst [vmem:[#allocation11 + $0x8] sm:$0xff] %v2052
          %p2055 = scmp.eq.s32.totalorder %s29, 1
          // Predicated region
          $region89: #{tpu_custom_call.1} parent=83 // pred_check
            %p2056 = pneg %p2055
          $region90: #{tpu_custom_call.1} parent=83 // pred_check_branch
            %2058 = sbr.rel (%p2056) target = $region92
          $region91: #{tpu_custom_call.1} parent=83 // pred_region
            %v2059 = vld [vmem:[#allocation11] sm:$0xff]
            %v2060 = vld [vmem:[#allocation11 + $0x8] sm:$0xff]
            %v2061 = vld [vmem:[%s9] sm:$0xff]
            %2063 = vset.pattern.permute.xlu0 0
            %2064 = vperm.xlu0 %2063, %v2061
            %v2065 = vpop.permute.xlu0 %2064
            %v2067 = vmul.f32 %v2059, %v2065
            %v2068 = vmul.f32 %v2060, %v2065
            %2069 = vst [vmem:[#allocation11] sm:$0xff] %v2067
            %2070 = vst [vmem:[#allocation11 + $0x8] sm:$0xff] %v2068
          $region92: #{tpu_custom_call.1} parent=83 // pred_fallthru
            _
        $region84: #{tpu_custom_call.1} parent=59 // pred_fallthru
          _
        // Predicated region
        $region93: #{tpu_custom_call.1} parent=59 // pred_check
          %p2071 = pneg %p274
        $region94: #{tpu_custom_call.1} parent=59 // pred_check_branch
          %2073 = sbr.rel (%p2071) target = $region96
        $region95: #{tpu_custom_call.1} parent=59 // pred_region
          %s2075 = ssub.s32 256, 256
          %2076 = vsyncadd [#allocation7], %s2075
          %s2078 = sshll.u32 [#allocation11], 4
          %s2079 = int_to_ptr.vmem [resolvable:$true] %s2078
          %2081 = dma.vmem_to_hbm [thread:$0]  %s2079, 256, %s10, [#allocation7]
        $region96: #{tpu_custom_call.1} parent=59 // pred_fallthru
          _
        // Predicated region
        $region97: #{tpu_custom_call.1} parent=59 // pred_check
          %p2082 = pneg %p274
        $region98: #{tpu_custom_call.1} parent=59 // pred_check_branch
          %2084 = sbr.rel (%p2082) target = $region100
        $region99: #{tpu_custom_call.1} parent=59 // pred_region
          %2085 = dma.done [#allocation7], 256
        $region100: #{tpu_custom_call.1} parent=59 // pred_fallthru
          _
      $region60: #{tpu_custom_call.1} parent=5 // pred_fallthru
        _
      %p2086 = scmp.le.s32.totalorder 2, %s19
      // Predicated region
      $region101: #{tpu_custom_call.1} parent=5 // pred_check
        %p2087 = pneg %p2086
      $region102: #{tpu_custom_call.1} parent=5 // pred_check_branch
        %2089 = sbr.rel (%p2087) target = $region104
      $region103: #{tpu_custom_call.1} parent=5 // pred_region
        %s2090 = ssub.s32 %s19, 2
      $region104: #{tpu_custom_call.1} parent=5 // pred_fallthru
        _
    $region6: #{tpu_custom_call.1} parent=1 // loop_footer
      %s23 = sadd.s32 1, %s19
    $region7: #{tpu_custom_call.1} parent=1 // loop_footer_branch
      %18 = sbr.rel target = $region3
    $region8: #{tpu_custom_call.1} parent=1 // loop_exit
      _
    %2091 = vsyncpa [#allocation6], 1
    %s2092 = scalar_lea.sflag [#allocation6], 1
    %2093 = vsyncpa %s2092, 1
    %2094 = vsyncpa [#allocation9], 1
    %2095 = vsyncpa [#allocation7], 1
    %s2096 = scalar_lea.sflag [#allocation7], 1
    %2097 = vsyncpa %s2096, 1

</llo_original>
